<compile_context>
chip_gen: v6e
topology: v6e:2x2x1
jax: 0.10.0
libtpu: 0.0.40
codegen_flags: <defaults>
</compile_context>

<pallas_src>
import functools

import jax
import jax.numpy as jnp
import numpy as np
from jax.experimental import pallas as pl
from jax.experimental.pallas import tpu as pltpu
from scipy.optimize import linear_sum_assignment


def _round_up(x: int, m: int) -> int:
    return (x + m - 1) // m * m


def _device_kind() -> str:
    try:
        return jax.devices()[0].device_kind.lower()
    except Exception:  # pragma: no cover
        return ""


def _default_box_dtype():
    # bf16 pairwise box math only where the VPU has a packed bf16 path.
    kind = _device_kind()
    if "v6" in kind or "v7" in kind:
        return jnp.bfloat16
    return jnp.float32


def _vmem_cap_bytes() -> int:
    kind = _device_kind()
    if "v7" in kind:
        return 48 << 20          # 64 MiB physical per TC on v7x
    if "v4" in kind or "v5" in kind or "v6" in kind:
        return 100 << 20         # 128 MiB physical VMEM parts
    return 48 << 20              # conservative default


def _cost_kernel(logits_ref, boxes_ref, onehot_ref, tbox_ref, c_ref,
                 *, w_class: float, w_bbox: float, w_giou: float, box_dtype):
    f32 = jnp.float32
    bd = box_dtype

    # ---- classification cost: -w_class * softmax(logits)[:, tgt_ids] -------
    # Normalization + weight deferred past the matmul and folded into one
    # [TN,1] scale vector; matmul runs in bf16 with f32 accumulation.
    logits = logits_ref[...]                                   # [TN, CP] f32
    m = jnp.max(logits, axis=-1, keepdims=True)
    e = jnp.exp(logits - m)                                    # [TN, CP] f32 (EUP)
    rowsum = jnp.sum(e, axis=-1, keepdims=True)                # [TN, 1]
    cc_unnorm = jnp.dot(e.astype(jnp.bfloat16), onehot_ref[...],
                        preferred_element_type=f32)            # [TN, TP]  (MXU)
    cls_scale = (-w_class) / rowsum                            # exact, [TN,1]
    cost_class_w = cc_unnorm * cls_scale                       # [TN, TP] f32

    # ---- box costs ----------------------------------------------------------
    ob = boxes_ref[...]                                        # [TN, 4]  (cx, cy, w, h)
    tb = tbox_ref[...]                                         # [4, TP]  (transposed)

    # L1 cdist with w_bbox pre-folded onto the small per-side tensors.
    obs = (w_bbox * ob).astype(bd)                             # [TN, 4]
    tbs = (w_bbox * tb).astype(bd)                             # [4, TP]
    cost_bbox_w = (jnp.abs(obs[:, 0:1] - tbs[0:1, :])
                   + jnp.abs(obs[:, 1:2] - tbs[1:2, :])
                   + jnp.abs(obs[:, 2:3] - tbs[2:3, :])
                   + jnp.abs(obs[:, 3:4] - tbs[3:4, :]))       # [TN, TP] bd (weighted)

    # cxcywh -> xyxy + areas on the cheap [TN,1] / [1,TP] vectors in f32,
    # single cast to the pairwise compute dtype.
    o_cx, o_cy, o_w, o_h = ob[:, 0:1], ob[:, 1:2], ob[:, 2:3], ob[:, 3:4]
    t_cx, t_cy, t_w, t_h = tb[0:1, :], tb[1:2, :], tb[2:3, :], tb[3:4, :]
    o_x0, o_y0 = o_cx - 0.5 * o_w, o_cy - 0.5 * o_h
    o_x1, o_y1 = o_cx + 0.5 * o_w, o_cy + 0.5 * o_h
    t_x0, t_y0 = t_cx - 0.5 * t_w, t_cy - 0.5 * t_h
    t_x1, t_y1 = t_cx + 0.5 * t_w, t_cy + 0.5 * t_h
    area_o = (o_x1 - o_x0) * (o_y1 - o_y0)                     # [TN, 1] f32
    area_t = (t_x1 - t_x0) * (t_y1 - t_y0)                     # [1, TP] f32

    ox0, oy0, ox1, oy1 = (v.astype(bd) for v in (o_x0, o_y0, o_x1, o_y1))
    tx0, ty0, tx1, ty1 = (v.astype(bd) for v in (t_x0, t_y0, t_x1, t_y1))

    # intersection / smallest enclosing box — pairwise [TN,TP] ops in bd.
    iw = jnp.maximum(jnp.minimum(ox1, tx1) - jnp.maximum(ox0, tx0), 0.0)
    ih = jnp.maximum(jnp.minimum(oy1, ty1) - jnp.maximum(oy0, ty0), 0.0)
    inter = (iw * ih).astype(f32)                              # [TN, TP]
    ew = jnp.maximum(jnp.maximum(ox1, tx1) - jnp.minimum(ox0, tx0), 0.0)
    eh = jnp.maximum(jnp.maximum(oy1, ty1) - jnp.minimum(oy0, ty0), 0.0)
    e_area = (ew * eh).astype(f32)                             # [TN, TP]

    union = (area_o + area_t) - inter                          # [TN, TP] f32

    # EUP approx reciprocals + one Newton step (f32): near-exact divisions
    # so near-tie costs don't flip the downstream assignment.
    # (No epsilon: degenerate zero-area boxes divide by zero exactly like the
    #  reference; padded rows/columns use benign unit boxes.)
    re_u = pl.reciprocal(union, approx=True)
    re_u = re_u * (2.0 - union * re_u)
    re_e = pl.reciprocal(e_area, approx=True)
    re_e = re_e * (2.0 - e_area * re_e)

    # giou = iou - (e_area - union)/e_area  =>  -giou = 1 - iou - union/e_area
    giou_cost_w = w_giou * ((1.0 - inter * re_u) - union * re_e)

    c_ref[...] = (cost_class_w + cost_bbox_w.astype(f32)
                  + giou_cost_w).astype(c_ref.dtype)


def _cost_matrix_padded(pred_logits, pred_boxes, tgt_ids, tgt_bbox,
                        cost_class=1.0, cost_bbox=1.0, cost_giou=1.0,
                        block_n=256, min_steps=4, box_dtype=None):
    """Runs the Pallas kernel; returns (C_padded [n_pad, t_pad], n, t)."""
    bs, nq, ncls = pred_logits.shape
    n = bs * nq
    t = int(tgt_bbox.shape[0])
    if t == 0:
        # Guard: zero targets -> zero-width cost matrix, no kernel call.
        return jnp.zeros((n, 0), jnp.float32), n, t

    f32 = jnp.float32
    if box_dtype is None:
        box_dtype = _default_box_dtype()

    cp = _round_up(ncls, 128)            # padded class (MXU K) dim
    tp = _round_up(t, 128)               # padded target (lane / MXU N) dim

    # Tile the N axis for >= min_steps grid steps (megacore + pipeline) while
    # keeping the tile small enough (<= block_n rows) to avoid vreg spills,
    # and bounding pad waste to < one tile.
    tn = _round_up(-(-n // min_steps), 8)
    tn = max(8, min(int(block_n), tn))
    n_pad = _round_up(n, tn)

    # Logits: pad extra rows/classes with -1e9 -> exp() == 0 for real rows,
    # softmax unchanged.  (Padded rows give cost_class = -w_class/CP; they are
    # sliced off on host.)
    logits2d = pred_logits.reshape(n, ncls).astype(f32)
    logits2d = jnp.pad(logits2d, ((0, n_pad - n), (0, cp - ncls)),
                       constant_values=-1e9)

    # Boxes: pad extra rows with a benign unit box so IoU/GIoU never hits 0/0.
    pad_box = jnp.array([0.5, 0.5, 1.0, 1.0], f32)
    boxes2d = pred_boxes.reshape(n, 4).astype(f32)
    if n_pad > n:
        boxes2d = jnp.concatenate(
            [boxes2d, jnp.broadcast_to(pad_box, (n_pad - n, 4))], axis=0)

    # One-hot [C_pad, T_pad] in bf16 (exactly representable): padded target
    # columns and padded class rows are all-zero -> zero class-cost contribution.
    onehot_t = jnp.zeros((cp, tp), jnp.bfloat16)
    onehot_t = onehot_t.at[:, :t].set(
        jax.nn.one_hot(tgt_ids, cp, dtype=jnp.bfloat16).T)

    # Target boxes transposed [4, T_pad]; padded columns are benign unit boxes.
    tbox_t = tgt_bbox.astype(f32).T
    if tp > t:
        tbox_t = jnp.concatenate(
            [tbox_t, jnp.broadcast_to(pad_box[:, None], (4, tp - t))], axis=1)

    # VMEM budget: double-buffered per-step tiles + resident operands +
    # tile-scaled headroom for elementwise intermediates, capped per chip.
    tile_bytes = 4 * tn * cp + 4 * tn * 128 + 4 * tn * tp
    resident_bytes = 2 * cp * tp + 4 * 8 * tp
    scratch_bytes = 10 * tn * tp * 4
    vmem_limit = int(min(2 * tile_bytes + 2 * resident_bytes
                         + scratch_bytes + (4 << 20), _vmem_cap_bytes()))

    def _run(single_buffer_resident, box_dt):
        kernel = functools.partial(_cost_kernel,
                                   w_class=float(cost_class),
                                   w_bbox=float(cost_bbox),
                                   w_giou=float(cost_giou),
                                   box_dtype=box_dt)
        resident_kwargs = (dict(pipeline_mode=pl.Buffered(1))
                           if single_buffer_resident else {})
        in_specs = [
            pl.BlockSpec((tn, cp), lambda i: (i, 0)),       # logits tile (pipelined)
            pl.BlockSpec((tn, 4), lambda i: (i, 0)),        # boxes tile (pipelined)
            pl.BlockSpec((cp, tp), lambda i: (0, 0),        # one-hot: resident
                         **resident_kwargs),
            pl.BlockSpec((4, tp), lambda i: (0, 0),         # target boxes: resident
                         **resident_kwargs),
        ]
        return pl.pallas_call(
            kernel,
            out_shape=jax.ShapeDtypeStruct((n_pad, tp), jnp.float32),
            grid=(n_pad // tn,),
            in_specs=in_specs,
            out_specs=pl.BlockSpec((tn, tp), lambda i: (i, 0)),
            compiler_params=pltpu.CompilerParams(
                dimension_semantics=("parallel",),          # megacore sharding on v7x
                vmem_limit_bytes=vmem_limit),
        )(logits2d, boxes2d, onehot_t, tbox_t)

    try:
        c = _run(True, box_dtype)
    except Exception:
        # Fallback (e.g. older jax without pipeline_mode): proven f32 +
        # double-buffered-resident configuration.
        c = _run(False, jnp.float32)
    return c, n, t


def hungarian_cost_matrix(pred_logits, pred_boxes, tgt_ids, tgt_bbox,
                          cost_class=1.0, cost_bbox=1.0, cost_giou=1.0,
                          block_n=256):
    """Device-side C of shape [bs, num_queries, total_targets]."""
    bs, nq, _ = pred_logits.shape
    c_pad, n, t = _cost_matrix_padded(pred_logits, pred_boxes, tgt_ids, tgt_bbox,
                                      cost_class=cost_class, cost_bbox=cost_bbox,
                                      cost_giou=cost_giou, block_n=block_n)
    return c_pad[:n, :t].reshape(bs, nq, t)


def hungarian_matcher(outputs, targets, cost_class=1.0, cost_bbox=1.0, cost_giou=1.0):
    """Full HungarianMatcher.forward: kernel cost matrix + host assignment."""
    pred_logits = outputs["pred_logits"]
    pred_boxes = outputs["pred_boxes"]
    bs, nq = pred_logits.shape[:2]

    tgt_ids = jnp.concatenate([v["labels"] for v in targets])
    tgt_bbox = jnp.concatenate([v["boxes"] for v in targets])

    c_pad, n, t = _cost_matrix_padded(pred_logits, pred_boxes, tgt_ids, tgt_bbox,
                                      cost_class=cost_class, cost_bbox=cost_bbox,
                                      cost_giou=cost_giou)
    c_pad = jax.block_until_ready(c_pad)
    # Slice + reshape on host numpy: no extra on-device HBM->HBM copy of C.
    c_host = np.asarray(c_pad)[:n, :t].reshape(bs, nq, t)

    idx_dtype = jnp.int64 if jax.config.jax_enable_x64 else jnp.int32
    sizes = [int(v["boxes"].shape[0]) for v in targets]
    indices = []
    col = 0
    for i, s in enumerate(sizes):
        sub = c_host[i, :, col:col + s]
        row_idx, col_idx = linear_sum_assignment(sub)
        indices.append((jnp.asarray(row_idx, dtype=idx_dtype),
                        jnp.asarray(col_idx, dtype=idx_dtype)))
        col += s
    return c_host, indices


def _reference_cost_matrix(pred_logits, pred_boxes, tgt_ids, tgt_bbox,
                           cost_class=1.0, cost_bbox=1.0, cost_giou=1.0):
    """Pure-JAX reference (mirrors the PyTorch math) for a correctness check."""
    bs, nq, _ = pred_logits.shape
    out_prob = jax.nn.softmax(pred_logits.reshape(bs * nq, -1), axis=-1)
    out_bbox = pred_boxes.reshape(bs * nq, 4)
    cc = -out_prob[:, tgt_ids]
    cb = jnp.sum(jnp.abs(out_bbox[:, None, :] - tgt_bbox[None, :, :]), axis=-1)

    def to_xyxy(b):
        cx, cy, w, h = b[..., 0], b[..., 1], b[..., 2], b[..., 3]
        return jnp.stack([cx - 0.5 * w, cy - 0.5 * h, cx + 0.5 * w, cy + 0.5 * h], -1)

    b1, b2 = to_xyxy(out_bbox), to_xyxy(tgt_bbox)
    a1 = (b1[:, 2] - b1[:, 0]) * (b1[:, 3] - b1[:, 1])
    a2 = (b2[:, 2] - b2[:, 0]) * (b2[:, 3] - b2[:, 1])
    lt = jnp.maximum(b1[:, None, :2], b2[None, :, :2])
    rb = jnp.minimum(b1[:, None, 2:], b2[None, :, 2:])
    wh = jnp.clip(rb - lt, 0.0)
    inter = wh[..., 0] * wh[..., 1]
    union = a1[:, None] + a2[None, :] - inter
    iou = inter / union
    lte = jnp.minimum(b1[:, None, :2], b2[None, :, :2])
    rbe = jnp.maximum(b1[:, None, 2:], b2[None, :, 2:])
    whe = jnp.clip(rbe - lte, 0.0)
    ea = whe[..., 0] * whe[..., 1]
    giou = iou - (ea - union) / ea
    c = cost_bbox * cb + cost_class * cc + cost_giou * (-giou)
    return c.reshape(bs, nq, -1)


if __name__ == "__main__":
    key = jax.random.PRNGKey(0)
    bs, num_queries, num_classes = 2, 8, 32
    sizes = [3, 5]  # num target boxes per batch element

    k1, k2, k3, k4, k5 = jax.random.split(key, 5)

    pred_logits = jax.random.normal(k1, (bs, num_queries, num_classes), jnp.float32)
    # predicted boxes in cxcywh with well-behaved sizes
    p_cxcy = jax.random.uniform(k2, (bs, num_queries, 2), minval=0.3, maxval=0.7)
    p_wh = jax.random.uniform(k3, (bs, num_queries, 2), minval=0.1, maxval=0.4)
    pred_boxes = jnp.concatenate([p_cxcy, p_wh], axis=-1).astype(jnp.float32)

    targets = []
    for i, s in enumerate(sizes):
        kl, kb1, kb2 = jax.random.split(jax.random.fold_in(k4, i), 3)
        labels = jax.random.randint(kl, (s,), 0, num_classes, dtype=jnp.int32)
        t_cxcy = jax.random.uniform(kb1, (s, 2), minval=0.3, maxval=0.7)
        t_wh = jax.random.uniform(kb2, (s, 2), minval=0.1, maxval=0.4)
        boxes = jnp.concatenate([t_cxcy, t_wh], axis=-1).astype(jnp.float32)
        targets.append({"labels": labels, "boxes": boxes})

    outputs = {"pred_logits": pred_logits, "pred_boxes": pred_boxes}

    C, indices = hungarian_matcher(outputs, targets,
                                   cost_class=1.0, cost_bbox=1.0, cost_giou=1.0)

    # Correctness check against a pure-JAX reference.  Tolerance covers the
    # bf16 classification matmul and (on v6e/v7x) bf16 pairwise box math; the
    # reciprocals now get a Newton refinement so they are near-exact.
    tgt_ids = jnp.concatenate([v["labels"] for v in targets])
    tgt_bbox = jnp.concatenate([v["boxes"] for v in targets])
    C_ref = _reference_cost_matrix(pred_logits, pred_boxes, tgt_ids, tgt_bbox)
    np.testing.assert_allclose(np.asarray(C), np.asarray(C_ref), rtol=3e-2, atol=3e-2)

    for i, (ri, cj) in enumerate(indices):
        assert ri.shape[0] == cj.shape[0] == min(num_queries, sizes[i])

    print("KERNEL_OK")
</pallas_src>

<mosaic_0001>
module attributes {stable_mosaic.version = 11 : i64} {
  func.func @_cost_kernel(%arg0: i32, %arg1: memref<8x128xf32, #tpu.memory_space<vmem>>, %arg2: memref<8x4xf32, #tpu.memory_space<vmem>>, %arg3: memref<128x128xbf16, #tpu.memory_space<vmem>>, %arg4: memref<4x128xf32, #tpu.memory_space<vmem>>, %arg5: memref<8x128xf32, #tpu.memory_space<vmem>>) attributes {dimension_semantics = [#tpu.dimension_semantics<parallel>], iteration_bounds = array<i64: 2>, scalar_prefetch = 0 : i64, scratch_operands = 0 : i64, tpu.core_type = #tpu.core_type<tc>, window_params = [{transform_indices = @transform_0, window_bounds = array<i64: 8, 128>}, {transform_indices = @transform_1, window_bounds = array<i64: 8, 4>}, {pipeline_mode = #tpu.pipeline_mode<synchronous>, transform_indices = @transform_2, window_bounds = array<i64: 128, 128>}, {pipeline_mode = #tpu.pipeline_mode<synchronous>, transform_indices = @transform_3, window_bounds = array<i64: 4, 128>}, {transform_indices = @transform_4, window_bounds = array<i64: 8, 128>}]} {
    %c0 = arith.constant 0 : index
    %c0_0 = arith.constant 0 : index
    %0 = vector.load %arg1[%c0, %c0_0] : memref<8x128xf32, #tpu.memory_space<vmem>>, vector<8x128xf32>
    %cst = arith.constant dense<0xFF800000> : vector<8xf32>
    %1 = vector.multi_reduction <maximumf>, %0, %cst [1] : vector<8x128xf32> to vector<8xf32>
    %2 = vector.shape_cast %1 : vector<8xf32> to vector<8x1xf32>
    %3 = vector.broadcast %2 : vector<8x1xf32> to vector<8x128xf32>
    %4 = arith.subf %0, %3 : vector<8x128xf32>
    %5 = math.exp %4 : vector<8x128xf32>
    %cst_1 = arith.constant dense<0.000000e+00> : vector<8xf32>
    %6 = vector.multi_reduction <add>, %5, %cst_1 [1] : vector<8x128xf32> to vector<8xf32>
    %7 = vector.shape_cast %6 : vector<8xf32> to vector<8x1xf32>
    %8 = arith.truncf %5 : vector<8x128xf32> to vector<8x128xbf16>
    %c0_2 = arith.constant 0 : index
    %c0_3 = arith.constant 0 : index
    %9 = vector.load %arg3[%c0_2, %c0_3] : memref<128x128xbf16, #tpu.memory_space<vmem>>, vector<128x128xbf16>
    %cst_4 = arith.constant dense<0.000000e+00> : vector<8x128xf32>
    %10 = tpu.matmul %8, %9, %cst_4 {dimension_numbers = #tpu.dot_dimension_numbers<[1], [0], [0], [1], [0, 0, 1, 1], [], []>} : vector<8x128xbf16>, vector<128x128xbf16>, vector<8x128xf32> -> vector<8x128xf32>
    %cst_5 = arith.constant -1.000000e+00 : f32
    %11 = vector.broadcast %cst_5 : f32 to vector<8x1xf32>
    %12 = arith.divf %11, %7 : vector<8x1xf32>
    %13 = vector.broadcast %12 : vector<8x1xf32> to vector<8x128xf32>
    %14 = arith.mulf %10, %13 : vector<8x128xf32>
    %c0_6 = arith.constant 0 : index
    %c0_7 = arith.constant 0 : index
    %15 = vector.load %arg2[%c0_6, %c0_7] : memref<8x4xf32, #tpu.memory_space<vmem>>, vector<8x4xf32>
    %c0_8 = arith.constant 0 : index
    %c0_9 = arith.constant 0 : index
    %16 = vector.load %arg4[%c0_8, %c0_9] : memref<4x128xf32, #tpu.memory_space<vmem>>, vector<4x128xf32>
    %cst_10 = arith.constant 1.000000e+00 : f32
    %17 = vector.broadcast %cst_10 : f32 to vector<8x4xf32>
    %18 = arith.mulf %17, %15 : vector<8x4xf32>
    %cst_11 = arith.constant 1.000000e+00 : f32
    %19 = vector.broadcast %cst_11 : f32 to vector<4x128xf32>
    %20 = arith.mulf %19, %16 : vector<4x128xf32>
    %21 = vector.extract_strided_slice %18 {offsets = [0, 0], sizes = [8, 1], strides = [1, 1]} : vector<8x4xf32> to vector<8x1xf32>
    %22 = vector.extract_strided_slice %20 {offsets = [0, 0], sizes = [1, 128], strides = [1, 1]} : vector<4x128xf32> to vector<1x128xf32>
    %23 = vector.broadcast %21 : vector<8x1xf32> to vector<8x128xf32>
    %24 = vector.broadcast %22 : vector<1x128xf32> to vector<8x128xf32>
    %25 = arith.subf %23, %24 : vector<8x128xf32>
    %26 = math.absf %25 : vector<8x128xf32>
    %27 = vector.extract_strided_slice %18 {offsets = [0, 1], sizes = [8, 1], strides = [1, 1]} : vector<8x4xf32> to vector<8x1xf32>
    %28 = vector.extract_strided_slice %20 {offsets = [1, 0], sizes = [1, 128], strides = [1, 1]} : vector<4x128xf32> to vector<1x128xf32>
    %29 = vector.broadcast %27 : vector<8x1xf32> to vector<8x128xf32>
    %30 = vector.broadcast %28 : vector<1x128xf32> to vector<8x128xf32>
    %31 = arith.subf %29, %30 : vector<8x128xf32>
    %32 = math.absf %31 : vector<8x128xf32>
    %33 = arith.addf %26, %32 : vector<8x128xf32>
    %34 = vector.extract_strided_slice %18 {offsets = [0, 2], sizes = [8, 1], strides = [1, 1]} : vector<8x4xf32> to vector<8x1xf32>
    %35 = vector.extract_strided_slice %20 {offsets = [2, 0], sizes = [1, 128], strides = [1, 1]} : vector<4x128xf32> to vector<1x128xf32>
    %36 = vector.broadcast %34 : vector<8x1xf32> to vector<8x128xf32>
    %37 = vector.broadcast %35 : vector<1x128xf32> to vector<8x128xf32>
    %38 = arith.subf %36, %37 : vector<8x128xf32>
    %39 = math.absf %38 : vector<8x128xf32>
    %40 = arith.addf %33, %39 : vector<8x128xf32>
    %41 = vector.extract_strided_slice %18 {offsets = [0, 3], sizes = [8, 1], strides = [1, 1]} : vector<8x4xf32> to vector<8x1xf32>
    %42 = vector.extract_strided_slice %20 {offsets = [3, 0], sizes = [1, 128], strides = [1, 1]} : vector<4x128xf32> to vector<1x128xf32>
    %43 = vector.broadcast %41 : vector<8x1xf32> to vector<8x128xf32>
    %44 = vector.broadcast %42 : vector<1x128xf32> to vector<8x128xf32>
    %45 = arith.subf %43, %44 : vector<8x128xf32>
    %46 = math.absf %45 : vector<8x128xf32>
    %47 = arith.addf %40, %46 : vector<8x128xf32>
    %48 = vector.extract_strided_slice %15 {offsets = [0, 0], sizes = [8, 1], strides = [1, 1]} : vector<8x4xf32> to vector<8x1xf32>
    %49 = vector.extract_strided_slice %15 {offsets = [0, 1], sizes = [8, 1], strides = [1, 1]} : vector<8x4xf32> to vector<8x1xf32>
    %50 = vector.extract_strided_slice %15 {offsets = [0, 2], sizes = [8, 1], strides = [1, 1]} : vector<8x4xf32> to vector<8x1xf32>
    %51 = vector.extract_strided_slice %15 {offsets = [0, 3], sizes = [8, 1], strides = [1, 1]} : vector<8x4xf32> to vector<8x1xf32>
    %52 = vector.extract_strided_slice %16 {offsets = [0, 0], sizes = [1, 128], strides = [1, 1]} : vector<4x128xf32> to vector<1x128xf32>
    %53 = vector.extract_strided_slice %16 {offsets = [1, 0], sizes = [1, 128], strides = [1, 1]} : vector<4x128xf32> to vector<1x128xf32>
    %54 = vector.extract_strided_slice %16 {offsets = [2, 0], sizes = [1, 128], strides = [1, 1]} : vector<4x128xf32> to vector<1x128xf32>
    %55 = vector.extract_strided_slice %16 {offsets = [3, 0], sizes = [1, 128], strides = [1, 1]} : vector<4x128xf32> to vector<1x128xf32>
    %cst_12 = arith.constant 5.000000e-01 : f32
    %56 = vector.broadcast %cst_12 : f32 to vector<8x1xf32>
    %57 = arith.mulf %56, %50 : vector<8x1xf32>
    %58 = arith.subf %48, %57 : vector<8x1xf32>
    %cst_13 = arith.constant 5.000000e-01 : f32
    %59 = vector.broadcast %cst_13 : f32 to vector<8x1xf32>
    %60 = arith.mulf %59, %51 : vector<8x1xf32>
    %61 = arith.subf %49, %60 : vector<8x1xf32>
    %cst_14 = arith.constant 5.000000e-01 : f32
    %62 = vector.broadcast %cst_14 : f32 to vector<8x1xf32>
    %63 = arith.mulf %62, %50 : vector<8x1xf32>
    %64 = arith.addf %48, %63 : vector<8x1xf32>
    %cst_15 = arith.constant 5.000000e-01 : f32
    %65 = vector.broadcast %cst_15 : f32 to vector<8x1xf32>
    %66 = arith.mulf %65, %51 : vector<8x1xf32>
    %67 = arith.addf %49, %66 : vector<8x1xf32>
    %cst_16 = arith.constant 5.000000e-01 : f32
    %68 = vector.broadcast %cst_16 : f32 to vector<1x128xf32>
    %69 = arith.mulf %68, %54 : vector<1x128xf32>
    %70 = arith.subf %52, %69 : vector<1x128xf32>
    %cst_17 = arith.constant 5.000000e-01 : f32
    %71 = vector.broadcast %cst_17 : f32 to vector<1x128xf32>
    %72 = arith.mulf %71, %55 : vector<1x128xf32>
    %73 = arith.subf %53, %72 : vector<1x128xf32>
    %cst_18 = arith.constant 5.000000e-01 : f32
    %74 = vector.broadcast %cst_18 : f32 to vector<1x128xf32>
    %75 = arith.mulf %74, %54 : vector<1x128xf32>
    %76 = arith.addf %52, %75 : vector<1x128xf32>
    %cst_19 = arith.constant 5.000000e-01 : f32
    %77 = vector.broadcast %cst_19 : f32 to vector<1x128xf32>
    %78 = arith.mulf %77, %55 : vector<1x128xf32>
    %79 = arith.addf %53, %78 : vector<1x128xf32>
    %80 = arith.subf %64, %58 : vector<8x1xf32>
    %81 = arith.subf %67, %61 : vector<8x1xf32>
    %82 = arith.mulf %80, %81 : vector<8x1xf32>
    %83 = arith.subf %76, %70 : vector<1x128xf32>
    %84 = arith.subf %79, %73 : vector<1x128xf32>
    %85 = arith.mulf %83, %84 : vector<1x128xf32>
    %86 = vector.broadcast %64 : vector<8x1xf32> to vector<8x128xf32>
    %87 = vector.broadcast %76 : vector<1x128xf32> to vector<8x128xf32>
    %88 = arith.minimumf %86, %87 : vector<8x128xf32>
    %89 = vector.broadcast %58 : vector<8x1xf32> to vector<8x128xf32>
    %90 = vector.broadcast %70 : vector<1x128xf32> to vector<8x128xf32>
    %91 = arith.maximumf %89, %90 : vector<8x128xf32>
    %92 = arith.subf %88, %91 : vector<8x128xf32>
    %cst_20 = arith.constant 0.000000e+00 : f32
    %93 = vector.broadcast %cst_20 : f32 to vector<8x128xf32>
    %94 = arith.maximumf %92, %93 : vector<8x128xf32>
    %95 = vector.broadcast %67 : vector<8x1xf32> to vector<8x128xf32>
    %96 = vector.broadcast %79 : vector<1x128xf32> to vector<8x128xf32>
    %97 = arith.minimumf %95, %96 : vector<8x128xf32>
    %98 = vector.broadcast %61 : vector<8x1xf32> to vector<8x128xf32>
    %99 = vector.broadcast %73 : vector<1x128xf32> to vector<8x128xf32>
    %100 = arith.maximumf %98, %99 : vector<8x128xf32>
    %101 = arith.subf %97, %100 : vector<8x128xf32>
    %cst_21 = arith.constant 0.000000e+00 : f32
    %102 = vector.broadcast %cst_21 : f32 to vector<8x128xf32>
    %103 = arith.maximumf %101, %102 : vector<8x128xf32>
    %104 = arith.mulf %94, %103 : vector<8x128xf32>
    %105 = vector.broadcast %64 : vector<8x1xf32> to vector<8x128xf32>
    %106 = vector.broadcast %76 : vector<1x128xf32> to vector<8x128xf32>
    %107 = arith.maximumf %105, %106 : vector<8x128xf32>
    %108 = vector.broadcast %58 : vector<8x1xf32> to vector<8x128xf32>
    %109 = vector.broadcast %70 : vector<1x128xf32> to vector<8x128xf32>
    %110 = arith.minimumf %108, %109 : vector<8x128xf32>
    %111 = arith.subf %107, %110 : vector<8x128xf32>
    %cst_22 = arith.constant 0.000000e+00 : f32
    %112 = vector.broadcast %cst_22 : f32 to vector<8x128xf32>
    %113 = arith.maximumf %111, %112 : vector<8x128xf32>
    %114 = vector.broadcast %67 : vector<8x1xf32> to vector<8x128xf32>
    %115 = vector.broadcast %79 : vector<1x128xf32> to vector<8x128xf32>
    %116 = arith.maximumf %114, %115 : vector<8x128xf32>
    %117 = vector.broadcast %61 : vector<8x1xf32> to vector<8x128xf32>
    %118 = vector.broadcast %73 : vector<1x128xf32> to vector<8x128xf32>
    %119 = arith.minimumf %117, %118 : vector<8x128xf32>
    %120 = arith.subf %116, %119 : vector<8x128xf32>
    %cst_23 = arith.constant 0.000000e+00 : f32
    %121 = vector.broadcast %cst_23 : f32 to vector<8x128xf32>
    %122 = arith.maximumf %120, %121 : vector<8x128xf32>
    %123 = arith.mulf %113, %122 : vector<8x128xf32>
    %124 = vector.broadcast %82 : vector<8x1xf32> to vector<8x128xf32>
    %125 = vector.broadcast %85 : vector<1x128xf32> to vector<8x128xf32>
    %126 = arith.addf %124, %125 : vector<8x128xf32>
    %127 = arith.subf %126, %104 : vector<8x128xf32>
    %128 = tpu.reciprocal %127 {approx = true} : vector<8x128xf32> -> vector<8x128xf32>
    %129 = arith.mulf %127, %128 : vector<8x128xf32>
    %cst_24 = arith.constant 2.000000e+00 : f32
    %130 = vector.broadcast %cst_24 : f32 to vector<8x128xf32>
    %131 = arith.subf %130, %129 : vector<8x128xf32>
    %132 = arith.mulf %128, %131 : vector<8x128xf32>
    %133 = tpu.reciprocal %123 {approx = true} : vector<8x128xf32> -> vector<8x128xf32>
    %134 = arith.mulf %123, %133 : vector<8x128xf32>
    %cst_25 = arith.constant 2.000000e+00 : f32
    %135 = vector.broadcast %cst_25 : f32 to vector<8x128xf32>
    %136 = arith.subf %135, %134 : vector<8x128xf32>
    %137 = arith.mulf %133, %136 : vector<8x128xf32>
    %138 = arith.mulf %104, %132 : vector<8x128xf32>
    %cst_26 = arith.constant 1.000000e+00 : f32
    %139 = vector.broadcast %cst_26 : f32 to vector<8x128xf32>
    %140 = arith.subf %139, %138 : vector<8x128xf32>
    %141 = arith.mulf %127, %137 : vector<8x128xf32>
    %142 = arith.subf %140, %141 : vector<8x128xf32>
    %cst_27 = arith.constant 1.000000e+00 : f32
    %143 = vector.broadcast %cst_27 : f32 to vector<8x128xf32>
    %144 = arith.mulf %143, %142 : vector<8x128xf32>
    %145 = arith.addf %14, %47 : vector<8x128xf32>
    %146 = arith.addf %145, %144 : vector<8x128xf32>
    %c0_28 = arith.constant 0 : index
    %c0_29 = arith.constant 0 : index
    %147 = vector.load %arg5[%c0_28, %c0_29] : memref<8x128xf32, #tpu.memory_space<vmem>>, vector<8x128xf32>
    tpu.vector_store %arg5[%c0_28, %c0_29], %146 {strides = array<i32>} : memref<8x128xf32, #tpu.memory_space<vmem>>, vector<8x128xf32>,
    return
  }
  func.func @transform_0(%arg0: i32) -> (i32, i32) {
    %c0_i32 = arith.constant 0 : i32
    %c0_i32_0 = arith.constant 0 : i32
    return %arg0, %c0_i32 : i32, i32
  }
  func.func @transform_1(%arg0: i32) -> (i32, i32) {
    %c0_i32 = arith.constant 0 : i32
    %c0_i32_0 = arith.constant 0 : i32
    return %arg0, %c0_i32 : i32, i32
  }
  func.func @transform_2(%arg0: i32) -> (i32, i32) {
    %c0_i32 = arith.constant 0 : i32
    %c0_i32_0 = arith.constant 0 : i32
    %c0_i32_1 = arith.constant 0 : i32
    return %c0_i32, %c0_i32_0 : i32, i32
  }
  func.func @transform_3(%arg0: i32) -> (i32, i32) {
    %c0_i32 = arith.constant 0 : i32
    %c0_i32_0 = arith.constant 0 : i32
    %c0_i32_1 = arith.constant 0 : i32
    return %c0_i32, %c0_i32_0 : i32, i32
  }
  func.func @transform_4(%arg0: i32) -> (i32, i32) {
    %c0_i32 = arith.constant 0 : i32
    %c0_i32_0 = arith.constant 0 : i32
    return %arg0, %c0_i32 : i32, i32
  }
}

module attributes {stable_mosaic.version = 11 : i64} {
  func.func @_cost_kernel(%arg0: i32, %arg1: memref<8x128xf32, #tpu.memory_space<vmem>>, %arg2: memref<8x4xf32, #tpu.memory_space<vmem>>, %arg3: memref<128x128xbf16, #tpu.memory_space<vmem>>, %arg4: memref<4x128xf32, #tpu.memory_space<vmem>>, %arg5: memref<8x128xf32, #tpu.memory_space<vmem>>) attributes {dimension_semantics = [#tpu.dimension_semantics<parallel>], iteration_bounds = array<i64: 2>, scalar_prefetch = 0 : i64, scratch_operands = 0 : i64, tpu.core_type = #tpu.core_type<tc>, window_params = [{transform_indices = @transform_0, window_bounds = array<i64: 8, 128>}, {transform_indices = @transform_1, window_bounds = array<i64: 8, 4>}, {pipeline_mode = #tpu.pipeline_mode<synchronous>, transform_indices = @transform_2, window_bounds = array<i64: 128, 128>}, {pipeline_mode = #tpu.pipeline_mode<synchronous>, transform_indices = @transform_3, window_bounds = array<i64: 4, 128>}, {transform_indices = @transform_4, window_bounds = array<i64: 8, 128>}]} {
    %c0 = arith.constant 0 : index
    %c0_0 = arith.constant 0 : index
    %0 = vector.load %arg1[%c0, %c0_0] : memref<8x128xf32, #tpu.memory_space<vmem>>, vector<8x128xf32>
    %cst = arith.constant dense<0xFF800000> : vector<8xf32>
    %1 = vector.multi_reduction <maximumf>, %0, %cst [1] : vector<8x128xf32> to vector<8xf32>
    %2 = vector.shape_cast %1 : vector<8xf32> to vector<8x1xf32>
    %3 = vector.broadcast %2 : vector<8x1xf32> to vector<8x128xf32>
    %4 = arith.subf %0, %3 : vector<8x128xf32>
    %5 = math.exp %4 : vector<8x128xf32>
    %cst_1 = arith.constant dense<0.000000e+00> : vector<8xf32>
    %6 = vector.multi_reduction <add>, %5, %cst_1 [1] : vector<8x128xf32> to vector<8xf32>
    %7 = vector.shape_cast %6 : vector<8xf32> to vector<8x1xf32>
    %8 = arith.truncf %5 : vector<8x128xf32> to vector<8x128xbf16>
    %c0_2 = arith.constant 0 : index
    %c0_3 = arith.constant 0 : index
    %9 = vector.load %arg3[%c0_2, %c0_3] : memref<128x128xbf16, #tpu.memory_space<vmem>>, vector<128x128xbf16>
    %cst_4 = arith.constant dense<0.000000e+00> : vector<8x128xf32>
    %10 = tpu.matmul %8, %9, %cst_4 {dimension_numbers = #tpu.dot_dimension_numbers<[1], [0], [0], [1], [0, 0, 1, 1], [], []>} : vector<8x128xbf16>, vector<128x128xbf16>, vector<8x128xf32> -> vector<8x128xf32>
    %cst_5 = arith.constant -1.000000e+00 : f32
    %11 = vector.broadcast %cst_5 : f32 to vector<8x1xf32>
    %12 = arith.divf %11, %7 : vector<8x1xf32>
    %13 = vector.broadcast %12 : vector<8x1xf32> to vector<8x128xf32>
    %14 = arith.mulf %10, %13 : vector<8x128xf32>
    %c0_6 = arith.constant 0 : index
    %c0_7 = arith.constant 0 : index
    %15 = vector.load %arg2[%c0_6, %c0_7] : memref<8x4xf32, #tpu.memory_space<vmem>>, vector<8x4xf32>
    %c0_8 = arith.constant 0 : index
    %c0_9 = arith.constant 0 : index
    %16 = vector.load %arg4[%c0_8, %c0_9] : memref<4x128xf32, #tpu.memory_space<vmem>>, vector<4x128xf32>
    %cst_10 = arith.constant 1.000000e+00 : f32
    %17 = vector.broadcast %cst_10 : f32 to vector<8x4xf32>
    %18 = arith.mulf %17, %15 : vector<8x4xf32>
    %cst_11 = arith.constant 1.000000e+00 : f32
    %19 = vector.broadcast %cst_11 : f32 to vector<4x128xf32>
    %20 = arith.mulf %19, %16 : vector<4x128xf32>
    %21 = vector.extract_strided_slice %18 {offsets = [0, 0], sizes = [8, 1], strides = [1, 1]} : vector<8x4xf32> to vector<8x1xf32>
    %22 = vector.extract_strided_slice %20 {offsets = [0, 0], sizes = [1, 128], strides = [1, 1]} : vector<4x128xf32> to vector<1x128xf32>
    %23 = vector.broadcast %21 : vector<8x1xf32> to vector<8x128xf32>
    %24 = vector.broadcast %22 : vector<1x128xf32> to vector<8x128xf32>
    %25 = arith.subf %23, %24 : vector<8x128xf32>
    %26 = math.absf %25 : vector<8x128xf32>
    %27 = vector.extract_strided_slice %18 {offsets = [0, 1], sizes = [8, 1], strides = [1, 1]} : vector<8x4xf32> to vector<8x1xf32>
    %28 = vector.extract_strided_slice %20 {offsets = [1, 0], sizes = [1, 128], strides = [1, 1]} : vector<4x128xf32> to vector<1x128xf32>
    %29 = vector.broadcast %27 : vector<8x1xf32> to vector<8x128xf32>
    %30 = vector.broadcast %28 : vector<1x128xf32> to vector<8x128xf32>
    %31 = arith.subf %29, %30 : vector<8x128xf32>
    %32 = math.absf %31 : vector<8x128xf32>
    %33 = arith.addf %26, %32 : vector<8x128xf32>
    %34 = vector.extract_strided_slice %18 {offsets = [0, 2], sizes = [8, 1], strides = [1, 1]} : vector<8x4xf32> to vector<8x1xf32>
    %35 = vector.extract_strided_slice %20 {offsets = [2, 0], sizes = [1, 128], strides = [1, 1]} : vector<4x128xf32> to vector<1x128xf32>
    %36 = vector.broadcast %34 : vector<8x1xf32> to vector<8x128xf32>
    %37 = vector.broadcast %35 : vector<1x128xf32> to vector<8x128xf32>
    %38 = arith.subf %36, %37 : vector<8x128xf32>
    %39 = math.absf %38 : vector<8x128xf32>
    %40 = arith.addf %33, %39 : vector<8x128xf32>
    %41 = vector.extract_strided_slice %18 {offsets = [0, 3], sizes = [8, 1], strides = [1, 1]} : vector<8x4xf32> to vector<8x1xf32>
    %42 = vector.extract_strided_slice %20 {offsets = [3, 0], sizes = [1, 128], strides = [1, 1]} : vector<4x128xf32> to vector<1x128xf32>
    %43 = vector.broadcast %41 : vector<8x1xf32> to vector<8x128xf32>
    %44 = vector.broadcast %42 : vector<1x128xf32> to vector<8x128xf32>
    %45 = arith.subf %43, %44 : vector<8x128xf32>
    %46 = math.absf %45 : vector<8x128xf32>
    %47 = arith.addf %40, %46 : vector<8x128xf32>
    %48 = vector.extract_strided_slice %15 {offsets = [0, 0], sizes = [8, 1], strides = [1, 1]} : vector<8x4xf32> to vector<8x1xf32>
    %49 = vector.extract_strided_slice %15 {offsets = [0, 1], sizes = [8, 1], strides = [1, 1]} : vector<8x4xf32> to vector<8x1xf32>
    %50 = vector.extract_strided_slice %15 {offsets = [0, 2], sizes = [8, 1], strides = [1, 1]} : vector<8x4xf32> to vector<8x1xf32>
    %51 = vector.extract_strided_slice %15 {offsets = [0, 3], sizes = [8, 1], strides = [1, 1]} : vector<8x4xf32> to vector<8x1xf32>
    %52 = vector.extract_strided_slice %16 {offsets = [0, 0], sizes = [1, 128], strides = [1, 1]} : vector<4x128xf32> to vector<1x128xf32>
    %53 = vector.extract_strided_slice %16 {offsets = [1, 0], sizes = [1, 128], strides = [1, 1]} : vector<4x128xf32> to vector<1x128xf32>
    %54 = vector.extract_strided_slice %16 {offsets = [2, 0], sizes = [1, 128], strides = [1, 1]} : vector<4x128xf32> to vector<1x128xf32>
    %55 = vector.extract_strided_slice %16 {offsets = [3, 0], sizes = [1, 128], strides = [1, 1]} : vector<4x128xf32> to vector<1x128xf32>
    %cst_12 = arith.constant 5.000000e-01 : f32
    %56 = vector.broadcast %cst_12 : f32 to vector<8x1xf32>
    %57 = arith.mulf %56, %50 : vector<8x1xf32>
    %58 = arith.subf %48, %57 : vector<8x1xf32>
    %cst_13 = arith.constant 5.000000e-01 : f32
    %59 = vector.broadcast %cst_13 : f32 to vector<8x1xf32>
    %60 = arith.mulf %59, %51 : vector<8x1xf32>
    %61 = arith.subf %49, %60 : vector<8x1xf32>
    %cst_14 = arith.constant 5.000000e-01 : f32
    %62 = vector.broadcast %cst_14 : f32 to vector<8x1xf32>
    %63 = arith.mulf %62, %50 : vector<8x1xf32>
    %64 = arith.addf %48, %63 : vector<8x1xf32>
    %cst_15 = arith.constant 5.000000e-01 : f32
    %65 = vector.broadcast %cst_15 : f32 to vector<8x1xf32>
    %66 = arith.mulf %65, %51 : vector<8x1xf32>
    %67 = arith.addf %49, %66 : vector<8x1xf32>
    %cst_16 = arith.constant 5.000000e-01 : f32
    %68 = vector.broadcast %cst_16 : f32 to vector<1x128xf32>
    %69 = arith.mulf %68, %54 : vector<1x128xf32>
    %70 = arith.subf %52, %69 : vector<1x128xf32>
    %cst_17 = arith.constant 5.000000e-01 : f32
    %71 = vector.broadcast %cst_17 : f32 to vector<1x128xf32>
    %72 = arith.mulf %71, %55 : vector<1x128xf32>
    %73 = arith.subf %53, %72 : vector<1x128xf32>
    %cst_18 = arith.constant 5.000000e-01 : f32
    %74 = vector.broadcast %cst_18 : f32 to vector<1x128xf32>
    %75 = arith.mulf %74, %54 : vector<1x128xf32>
    %76 = arith.addf %52, %75 : vector<1x128xf32>
    %cst_19 = arith.constant 5.000000e-01 : f32
    %77 = vector.broadcast %cst_19 : f32 to vector<1x128xf32>
    %78 = arith.mulf %77, %55 : vector<1x128xf32>
    %79 = arith.addf %53, %78 : vector<1x128xf32>
    %80 = arith.subf %64, %58 : vector<8x1xf32>
    %81 = arith.subf %67, %61 : vector<8x1xf32>
    %82 = arith.mulf %80, %81 : vector<8x1xf32>
    %83 = arith.subf %76, %70 : vector<1x128xf32>
    %84 = arith.subf %79, %73 : vector<1x128xf32>
    %85 = arith.mulf %83, %84 : vector<1x128xf32>
    %86 = vector.broadcast %64 : vector<8x1xf32> to vector<8x128xf32>
    %87 = vector.broadcast %76 : vector<1x128xf32> to vector<8x128xf32>
    %88 = arith.minimumf %86, %87 : vector<8x128xf32>
    %89 = vector.broadcast %58 : vector<8x1xf32> to vector<8x128xf32>
    %90 = vector.broadcast %70 : vector<1x128xf32> to vector<8x128xf32>
    %91 = arith.maximumf %89, %90 : vector<8x128xf32>
    %92 = arith.subf %88, %91 : vector<8x128xf32>
    %cst_20 = arith.constant 0.000000e+00 : f32
    %93 = vector.broadcast %cst_20 : f32 to vector<8x128xf32>
    %94 = arith.maximumf %92, %93 : vector<8x128xf32>
    %95 = vector.broadcast %67 : vector<8x1xf32> to vector<8x128xf32>
    %96 = vector.broadcast %79 : vector<1x128xf32> to vector<8x128xf32>
    %97 = arith.minimumf %95, %96 : vector<8x128xf32>
    %98 = vector.broadcast %61 : vector<8x1xf32> to vector<8x128xf32>
    %99 = vector.broadcast %73 : vector<1x128xf32> to vector<8x128xf32>
    %100 = arith.maximumf %98, %99 : vector<8x128xf32>
    %101 = arith.subf %97, %100 : vector<8x128xf32>
    %cst_21 = arith.constant 0.000000e+00 : f32
    %102 = vector.broadcast %cst_21 : f32 to vector<8x128xf32>
    %103 = arith.maximumf %101, %102 : vector<8x128xf32>
    %104 = arith.mulf %94, %103 : vector<8x128xf32>
    %105 = vector.broadcast %64 : vector<8x1xf32> to vector<8x128xf32>
    %106 = vector.broadcast %76 : vector<1x128xf32> to vector<8x128xf32>
    %107 = arith.maximumf %105, %106 : vector<8x128xf32>
    %108 = vector.broadcast %58 : vector<8x1xf32> to vector<8x128xf32>
    %109 = vector.broadcast %70 : vector<1x128xf32> to vector<8x128xf32>
    %110 = arith.minimumf %108, %109 : vector<8x128xf32>
    %111 = arith.subf %107, %110 : vector<8x128xf32>
    %cst_22 = arith.constant 0.000000e+00 : f32
    %112 = vector.broadcast %cst_22 : f32 to vector<8x128xf32>
    %113 = arith.maximumf %111, %112 : vector<8x128xf32>
    %114 = vector.broadcast %67 : vector<8x1xf32> to vector<8x128xf32>
    %115 = vector.broadcast %79 : vector<1x128xf32> to vector<8x128xf32>
    %116 = arith.maximumf %114, %115 : vector<8x128xf32>
    %117 = vector.broadcast %61 : vector<8x1xf32> to vector<8x128xf32>
    %118 = vector.broadcast %73 : vector<1x128xf32> to vector<8x128xf32>
    %119 = arith.minimumf %117, %118 : vector<8x128xf32>
    %120 = arith.subf %116, %119 : vector<8x128xf32>
    %cst_23 = arith.constant 0.000000e+00 : f32
    %121 = vector.broadcast %cst_23 : f32 to vector<8x128xf32>
    %122 = arith.maximumf %120, %121 : vector<8x128xf32>
    %123 = arith.mulf %113, %122 : vector<8x128xf32>
    %124 = vector.broadcast %82 : vector<8x1xf32> to vector<8x128xf32>
    %125 = vector.broadcast %85 : vector<1x128xf32> to vector<8x128xf32>
    %126 = arith.addf %124, %125 : vector<8x128xf32>
    %127 = arith.subf %126, %104 : vector<8x128xf32>
    %128 = tpu.reciprocal %127 {approx = true} : vector<8x128xf32> -> vector<8x128xf32>
    %129 = arith.mulf %127, %128 : vector<8x128xf32>
    %cst_24 = arith.constant 2.000000e+00 : f32
    %130 = vector.broadcast %cst_24 : f32 to vector<8x128xf32>
    %131 = arith.subf %130, %129 : vector<8x128xf32>
    %132 = arith.mulf %128, %131 : vector<8x128xf32>
    %133 = tpu.reciprocal %123 {approx = true} : vector<8x128xf32> -> vector<8x128xf32>
    %134 = arith.mulf %123, %133 : vector<8x128xf32>
    %cst_25 = arith.constant 2.000000e+00 : f32
    %135 = vector.broadcast %cst_25 : f32 to vector<8x128xf32>
    %136 = arith.subf %135, %134 : vector<8x128xf32>
    %137 = arith.mulf %133, %136 : vector<8x128xf32>
    %138 = arith.mulf %104, %132 : vector<8x128xf32>
    %cst_26 = arith.constant 1.000000e+00 : f32
    %139 = vector.broadcast %cst_26 : f32 to vector<8x128xf32>
    %140 = arith.subf %139, %138 : vector<8x128xf32>
    %141 = arith.mulf %127, %137 : vector<8x128xf32>
    %142 = arith.subf %140, %141 : vector<8x128xf32>
    %cst_27 = arith.constant 1.000000e+00 : f32
    %143 = vector.broadcast %cst_27 : f32 to vector<8x128xf32>
    %144 = arith.mulf %143, %142 : vector<8x128xf32>
    %145 = arith.addf %14, %47 : vector<8x128xf32>
    %146 = arith.addf %145, %144 : vector<8x128xf32>
    %c0_28 = arith.constant 0 : index
    %c0_29 = arith.constant 0 : index
    %147 = vector.load %arg5[%c0_28, %c0_29] : memref<8x128xf32, #tpu.memory_space<vmem>>, vector<8x128xf32>
    tpu.vector_store %arg5[%c0_28, %c0_29], %146 {strides = array<i32>} : memref<8x128xf32, #tpu.memory_space<vmem>>, vector<8x128xf32>,
    return
  }
  func.func @transform_0(%arg0: i32) -> (i32, i32) {
    %c0_i32 = arith.constant 0 : i32
    %c0_i32_0 = arith.constant 0 : i32
    return %arg0, %c0_i32 : i32, i32
  }
  func.func @transform_1(%arg0: i32) -> (i32, i32) {
    %c0_i32 = arith.constant 0 : i32
    %c0_i32_0 = arith.constant 0 : i32
    return %arg0, %c0_i32 : i32, i32
  }
  func.func @transform_2(%arg0: i32) -> (i32, i32) {
    %c0_i32 = arith.constant 0 : i32
    %c0_i32_0 = arith.constant 0 : i32
    %c0_i32_1 = arith.constant 0 : i32
    return %c0_i32, %c0_i32_0 : i32, i32
  }
  func.func @transform_3(%arg0: i32) -> (i32, i32) {
    %c0_i32 = arith.constant 0 : i32
    %c0_i32_0 = arith.constant 0 : i32
    %c0_i32_1 = arith.constant 0 : i32
    return %c0_i32, %c0_i32_0 : i32, i32
  }
  func.func @transform_4(%arg0: i32) -> (i32, i32) {
    %c0_i32 = arith.constant 0 : i32
    %c0_i32_0 = arith.constant 0 : i32
    return %arg0, %c0_i32 : i32, i32
  }
}

</mosaic_0001>

<llo_original>
// kernel: tpu_custom_call.1
$region0: #{tpu_custom_call.1}
  #allocation0 [shape = 'u32[]', space=smem, size = 0x4, offset = 0x4, fixed_abs, tag = 'smem constant byte address 0x4 - core index']
  #allocation1 [shape = 'u32[144,128]{1,0:T(1,128)}', space=vmem, size = 0x12000, scoped, tag = 'internal scratch']
  %s0 = inlined_call_operand.vmem [shape: f32[16,128], index: 0, kind: input, shape index: {}]
  %s1 = inlined_call_operand.vmem [shape: f32[16,4], index: 1, kind: input, shape index: {}]
  %s2 = inlined_call_operand.hbm [shape: bf16[128,128], index: 2, kind: input, shape index: {}]
  %s3 = inlined_call_operand.vmem [shape: f32[4,128], index: 3, kind: input, shape index: {}]
  %s4 = inlined_call_operand.hbm [shape: f32[16,128], index: 4, kind: output, shape index: {}]
  %s5 = sld [smem:[#allocation0]]
  $region53: #{tpu_custom_call.1} parent=0
    _
  %s7 = ssub.s32 1, %s5
  %s8 = scalar_select 0, %s7, %s5
  $region1: #{tpu_custom_call.1} parent=0
    #allocation2 [shape = 'u8[32768]{0}', space=vmem, size = 0x8000, scoped, tag = 'input window, operand 2, single buffered']
    #allocation3 [shape = 's32[2]{0}', space=sflag, size = 0x8, scoped, tag = 'scoped memory for tpu_custom_call.1']
    #allocation4 [shape = 's32[2]{0}', space=sflag, size = 0x8, scoped, tag = 'scoped memory for tpu_custom_call.1']
    #allocation5 [shape = 'u8[8192]{0}', space=vmem, size = 0x2000, scoped, tag = 'output window, operand 0']
    %9 = vsyncpa [#allocation3], 0
    %10 = vsyncpa [#allocation4], 0
    %s11 = scalar_lea.sflag [#allocation4], 1
    %12 = vsyncpa %s11, 0
    loop: start=0, step=1, limit=4
    $region2: #{tpu_custom_call.1} parent=1 // loop_pre_header
      _
    $region3: #{tpu_custom_call.1} parent=1 // loop_header
      %s14 = sphi 0, %s18
      %p15 = scmp.ge.s32.totalorder %s14, 4
      %s24 = sphi 0, %s26
      %s27 = sphi 0, %s24
      %s28 = sphi 0, %s27
      %s44 = sphi 0, %s28
      %s50 = sphi 0, %s52
      %s53 = sphi 0, %s50
      %s54 = sphi 0, %s53
      %s70 = sphi 0, %s54
      %s74 = sphi 0, %s74
      %s76 = sphi 0, %s74
      %s77 = sphi 0, %s76
      %s91 = sphi 0, %s77
      %s95 = sphi 0, %s95
      %s97 = sphi 0, %s95
      %s98 = sphi 0, %s97
      %s112 = sphi 0, %s98
      %s118 = sphi 0, %s120
      %s121 = sphi 0, %s118
      %s122 = sphi 0, %s121
      %s138 = sphi 0, %s122
    $region4: #{tpu_custom_call.1} parent=1 // loop_header_branch
      %17 = sbr.rel (%p15) target = $region8
    $region5: #{tpu_custom_call.1} parent=1 // loop_body
      %s19 = ssub.s32 %s14, 1
      %s20 = ssub.s32 %s14, 2
      %s21 = sadd.s32 %s14, 1
      %s22 = ssub.s32 %s14, %s21
      %p23 = scmp.eq.s32.totalorder %s22, 0
      %s25 = sadd.s32 %s24, 1
      %s26 = scalar_select %p23, %s24, %s25
      %p29 = pneg %p23
      %p30 = scmp.eq.s32.totalorder %s14, 1
      %p31 = por %p29, %p30
      %p32 = scmp.ne.s32.totalorder %s24, %s27
      %p33 = scmp.eq.s32.totalorder %s14, 0
      %p34 = por %p32, %p33
      %p35 = scmp.ne.s32.totalorder %s24, %s27
      %p36 = scmp.eq.s32.totalorder %s19, 1
      %p37 = por %p35, %p36
      %p38 = scmp.ne.s32.totalorder %s27, %s28
      %p39 = scmp.eq.s32.totalorder %s19, 0
      %p40 = por %p38, %p39
      %p41 = scmp.ne.s32.totalorder %s27, %s28
      %p42 = scmp.eq.s32.totalorder %s20, 1
      %p43 = por %p41, %p42
      %p45 = scmp.ne.s32.totalorder %s28, %s44
      %p46 = scmp.eq.s32.totalorder %s20, 0
      %p47 = por %p45, %p46
      %s48 = ssub.s32 %s14, %s21
      %p49 = scmp.eq.s32.totalorder %s48, 0
      %s51 = sadd.s32 %s50, 1
      %s52 = scalar_select %p49, %s50, %s51
      %p55 = pneg %p49
      %p56 = scmp.eq.s32.totalorder %s14, 1
      %p57 = por %p55, %p56
      %p58 = scmp.ne.s32.totalorder %s50, %s53
      %p59 = scmp.eq.s32.totalorder %s14, 0
      %p60 = por %p58, %p59
      %p61 = scmp.ne.s32.totalorder %s50, %s53
      %p62 = scmp.eq.s32.totalorder %s19, 1
      %p63 = por %p61, %p62
      %p64 = scmp.ne.s32.totalorder %s53, %s54
      %p65 = scmp.eq.s32.totalorder %s19, 0
      %p66 = por %p64, %p65
      %p67 = scmp.ne.s32.totalorder %s53, %s54
      %p68 = scmp.eq.s32.totalorder %s20, 1
      %p69 = por %p67, %p68
      %p71 = scmp.ne.s32.totalorder %s54, %s70
      %p72 = scmp.eq.s32.totalorder %s20, 0
      %p73 = por %p71, %p72
      %s75 = sadd.s32 %s74, 1
      %p78 = scmp.eq.s32.totalorder %s14, 1
      %p79 = scmp.ne.s32.totalorder %s74, %s76
      %p80 = scmp.eq.s32.totalorder %s14, 0
      %p81 = por %p79, %p80
      %p82 = scmp.ne.s32.totalorder %s74, %s76
      %p83 = scmp.eq.s32.totalorder %s19, 1
      %p84 = por %p82, %p83
      %p85 = scmp.ne.s32.totalorder %s76, %s77
      %p86 = scmp.eq.s32.totalorder %s19, 0
      %p87 = por %p85, %p86
      %p88 = scmp.ne.s32.totalorder %s76, %s77
      %p89 = scmp.eq.s32.totalorder %s20, 1
      %p90 = por %p88, %p89
      %p92 = scmp.ne.s32.totalorder %s77, %s91
      %p93 = scmp.eq.s32.totalorder %s20, 0
      %p94 = por %p92, %p93
      %s96 = sadd.s32 %s95, 1
      %p99 = scmp.eq.s32.totalorder %s14, 1
      %p100 = scmp.ne.s32.totalorder %s95, %s97
      %p101 = scmp.eq.s32.totalorder %s14, 0
      %p102 = por %p100, %p101
      %p103 = scmp.ne.s32.totalorder %s95, %s97
      %p104 = scmp.eq.s32.totalorder %s19, 1
      %p105 = por %p103, %p104
      %p106 = scmp.ne.s32.totalorder %s97, %s98
      %p107 = scmp.eq.s32.totalorder %s19, 0
      %p108 = por %p106, %p107
      %p109 = scmp.ne.s32.totalorder %s97, %s98
      %p110 = scmp.eq.s32.totalorder %s20, 1
      %p111 = por %p109, %p110
      %p113 = scmp.ne.s32.totalorder %s98, %s112
      %p114 = scmp.eq.s32.totalorder %s20, 0
      %p115 = por %p113, %p114
      %s116 = ssub.s32 %s14, %s21
      %p117 = scmp.eq.s32.totalorder %s116, 0
      %s119 = sadd.s32 %s118, 1
      %s120 = scalar_select %p117, %s118, %s119
      %p123 = pneg %p117
      %p124 = scmp.eq.s32.totalorder %s14, 1
      %p125 = por %p123, %p124
      %p126 = scmp.ne.s32.totalorder %s118, %s121
      %p127 = scmp.eq.s32.totalorder %s14, 0
      %p128 = por %p126, %p127
      %p129 = scmp.ne.s32.totalorder %s118, %s121
      %p130 = scmp.eq.s32.totalorder %s19, 1
      %p131 = por %p129, %p130
      %p132 = scmp.ne.s32.totalorder %s121, %s122
      %p133 = scmp.eq.s32.totalorder %s19, 0
      %p134 = por %p132, %p133
      %p135 = scmp.ne.s32.totalorder %s121, %s122
      %p136 = scmp.eq.s32.totalorder %s20, 1
      %p137 = por %p135, %p136
      %p139 = scmp.ne.s32.totalorder %s122, %s138
      %p140 = scmp.eq.s32.totalorder %s20, 0
      %p141 = por %p139, %p140
      %p142 = scmp.le.s32.totalorder 1, %s14
      %p143 = scmp.lt.s32.totalorder %s14, 3
      %p144 = pnand %p142, %p143
      %p145 = pneg %p144
      // Predicated region
      $region9: #{tpu_custom_call.1} parent=5 // pred_check
        _
      $region10: #{tpu_custom_call.1} parent=5 // pred_check_branch
        %147 = sbr.rel (%p144) target = $region12
      $region11: #{tpu_custom_call.1} parent=5 // pred_region
        %s148 = ssub.s32 %s14, 1
        // Predicated region
        $region13: #{tpu_custom_call.1} parent=11 // pred_check
          %p149 = pneg %p87
        $region14: #{tpu_custom_call.1} parent=11 // pred_check_branch
          %151 = sbr.rel (%p149) target = $region16
        $region15: #{tpu_custom_call.1} parent=11 // pred_region
          %s153 = ssub.s32 1024, 1024
          %154 = vsyncadd [#allocation3], %s153
          %s155 = sshll.u32 [#allocation2], 4
          %s156 = int_to_ptr.vmem [resolvable:$true] %s155
          %161 = dma.hbm_to_vmem [thread:$0]  %s2, 1024, %s156, [#allocation3], 64, 64, 4
        $region16: #{tpu_custom_call.1} parent=11 // pred_fallthru
          _
        // Predicated region
        $region17: #{tpu_custom_call.1} parent=11 // pred_check
          %p162 = pneg %p108
        $region18: #{tpu_custom_call.1} parent=11 // pred_check_branch
          %164 = sbr.rel (%p162) target = $region20
        $region19: #{tpu_custom_call.1} parent=11 // pred_region
          _
        $region20: #{tpu_custom_call.1} parent=11 // pred_fallthru
          _
      $region12: #{tpu_custom_call.1} parent=5 // pred_fallthru
        _
      %p165 = scmp.lt.s32.totalorder %s14, 2
      // Predicated region
      $region21: #{tpu_custom_call.1} parent=5 // pred_check
        %p166 = pneg %p165
      $region22: #{tpu_custom_call.1} parent=5 // pred_check_branch
        %168 = sbr.rel (%p166) target = $region24
      $region23: #{tpu_custom_call.1} parent=5 // pred_region
        // Predicated region
        $region25: #{tpu_custom_call.1} parent=23 // pred_check
          %p169 = pneg %p34
        $region26: #{tpu_custom_call.1} parent=23 // pred_check_branch
          %171 = sbr.rel (%p169) target = $region28
        $region27: #{tpu_custom_call.1} parent=23 // pred_region
          %p172 = scmp.lt.s32.totalorder %s14, 1
          %s173 = scalar_select %p172, %s14, 1
          %s174 = smul.addr %s173, 8
          %s175 = scalar_lea.vmem %s0, %s174
        $region28: #{tpu_custom_call.1} parent=23 // pred_fallthru
          _
        // Predicated region
        $region29: #{tpu_custom_call.1} parent=23 // pred_check
          %p176 = pneg %p60
        $region30: #{tpu_custom_call.1} parent=23 // pred_check_branch
          %178 = sbr.rel (%p176) target = $region32
        $region31: #{tpu_custom_call.1} parent=23 // pred_region
          %p179 = scmp.lt.s32.totalorder %s14, 1
          %s180 = scalar_select %p179, %s14, 1
          %s181 = smul.addr %s180, 8
          %s182 = scalar_lea.vmem %s1, %s181
        $region32: #{tpu_custom_call.1} parent=23 // pred_fallthru
          _
      $region24: #{tpu_custom_call.1} parent=5 // pred_fallthru
        _
      %p183 = scmp.le.s32.totalorder 1, %s14
      %p184 = scmp.lt.s32.totalorder %s14, 3
      %p185 = pnand %p183, %p184
      %p186 = pneg %p185
      // Predicated region
      $region33: #{tpu_custom_call.1} parent=5 // pred_check
        _
      $region34: #{tpu_custom_call.1} parent=5 // pred_check_branch
        %188 = sbr.rel (%p185) target = $region36
      $region35: #{tpu_custom_call.1} parent=5 // pred_region
        %s189 = ssub.s32 %s14, 1
        // Predicated region
        $region37: #{tpu_custom_call.1} parent=35 // pred_check
          %p190 = pneg %p87
        $region38: #{tpu_custom_call.1} parent=35 // pred_check_branch
          %192 = sbr.rel (%p190) target = $region40
        $region39: #{tpu_custom_call.1} parent=35 // pred_region
          %193 = dma.done [#allocation3], 1024
        $region40: #{tpu_custom_call.1} parent=35 // pred_fallthru
          _
        %p194 = scmp.lt.s32.totalorder %s19, 1
        %s195 = scalar_select %p194, %s19, 1
        %s196 = smul.addr %s195, 8
        %s197 = scalar_lea.vmem %s0, %s196
        %p198 = pneg %p40
        %p199 = pneg %p37
        %p200 = scmp.lt.s32.totalorder %s19, 1
        %s201 = scalar_select %p200, %s19, 1
        %s202 = smul.addr %s201, 8
        %s203 = scalar_lea.vmem %s1, %s202
        %p204 = pneg %p66
        %p205 = pneg %p63
        %p206 = pneg %p87
        %p207 = pneg %p84
        %p208 = pneg %p108
        %p209 = pneg %p105
        %p210 = pneg %p134
        %p211 = pneg %p131
        %s212 = sand.u32 %s121, 1
        %s213 = scalar_lea.sflag [#allocation4], %s212
        %s214 = sand.u32 %s121, 1
        %s215 = smul.addr %s214, 8
        %s216 = scalar_lea.vmem [#allocation5], %s215
        %p217 = scmp.lt.s32.totalorder %s19, 1
        %s218 = scalar_select %p217, %s19, 1
        %s219 = smul.addr %s218, 8
        %s220 = scalar_lea.vmem %s0, %s219
        %p221 = scmp.lt.s32.totalorder %s19, 1
        %s222 = scalar_select %p221, %s19, 1
        %s223 = smul.addr %s222, 8
        %s224 = scalar_lea.vmem %s1, %s223
        %v226 = vld [vmem:[%s220] sm:$0xff]
        %227 = vmax.xlane.f32.xlu0 %v226
        %v228 = vpop.xlane.xlu0 %227
        %v229 = vsub.f32 %v226, %v228
        %v230 = vmul.f32 %v229, 1.442695
        %v231 = vpow.pop %v230
        %232 = vadd.xlane.f32.xlu0 %v231
        %v233 = vpop.xlane.xlu0 %232
        %v234 = vpack.c.bf16 %v231, %v231
        %v235 = vld [vmem:[#allocation2] sm:$0xf]
        %v236 = vld [vmem:[#allocation2 + $0x4] sm:$0xf]
        %v237 = vld [vmem:[#allocation2 + $0x8] sm:$0xf]
        %v238 = vld [vmem:[#allocation2 + $0xc] sm:$0xf]
        %v239 = vld [vmem:[#allocation2 + $0x10] sm:$0xf]
        %v240 = vld [vmem:[#allocation2 + $0x14] sm:$0xf]
        %v241 = vld [vmem:[#allocation2 + $0x18] sm:$0xf]
        %v242 = vld [vmem:[#allocation2 + $0x1c] sm:$0xf]
        %v243 = vld [vmem:[#allocation2 + $0x20] sm:$0xf]
        %v244 = vld [vmem:[#allocation2 + $0x24] sm:$0xf]
        %v245 = vld [vmem:[#allocation2 + $0x28] sm:$0xf]
        %v246 = vld [vmem:[#allocation2 + $0x2c] sm:$0xf]
        %v247 = vld [vmem:[#allocation2 + $0x30] sm:$0xf]
        %v248 = vld [vmem:[#allocation2 + $0x34] sm:$0xf]
        %v249 = vld [vmem:[#allocation2 + $0x38] sm:$0xf]
        %v250 = vld [vmem:[#allocation2 + $0x3c] sm:$0xf]
        %v267 = vunpack.c.l.b16 %v235
        %v268 = vunpack.c.l.b16 %v236
        %v269 = vunpack.c.l.b16 %v237
        %v270 = vunpack.c.l.b16 %v238
        %v271 = vunpack.c.l.b16 %v239
        %v272 = vunpack.c.l.b16 %v240
        %v273 = vunpack.c.l.b16 %v241
        %v274 = vunpack.c.l.b16 %v242
        %v275 = vunpack.c.l.b16 %v243
        %v276 = vunpack.c.l.b16 %v244
        %v277 = vunpack.c.l.b16 %v245
        %v278 = vunpack.c.l.b16 %v246
        %v279 = vunpack.c.l.b16 %v247
        %v280 = vunpack.c.l.b16 %v248
        %v281 = vunpack.c.l.b16 %v249
        %v282 = vunpack.c.l.b16 %v250
        %v283 = vpack.c.b16 %v268, %v267
        %v284 = vpack.c.b16 %v270, %v269
        %v285 = vpack.c.b16 %v272, %v271
        %v286 = vpack.c.b16 %v274, %v273
        %v287 = vpack.c.b16 %v276, %v275
        %v288 = vpack.c.b16 %v278, %v277
        %v289 = vpack.c.b16 %v280, %v279
        %v290 = vpack.c.b16 %v282, %v281
        %299 = vmatprep.subr.bf16.mxu0 0
        %300 = vmatpush1.bf16.msra.mxu0 %v290
        %301 = vmatprep.subr.bf16.mxu0 0
        %302 = vmatpush1.bf16.msra.mxu0 %v289
        %303 = vmatprep.subr.bf16.mxu0 0
        %304 = vmatpush1.bf16.msra.mxu0 %v288
        %305 = vmatprep.subr.bf16.mxu0 0
        %306 = vmatpush1.bf16.msra.mxu0 %v287
        %307 = vmatprep.subr.bf16.mxu0 0
        %308 = vmatpush1.bf16.msra.mxu0 %v286
        %309 = vmatprep.subr.bf16.mxu0 0
        %310 = vmatpush1.bf16.msra.mxu0 %v285
        %311 = vmatprep.subr.bf16.mxu0 0
        %312 = vmatpush1.bf16.msra.mxu0 %v284
        %313 = vmatprep.subr.bf16.mxu0 0
        %314 = vmatpush1.bf16.msra.mxu0 %v283
        %315 = vmatprep.subr.bf16.mxu0 0
        %316 = vmatpush2.bf16.msra.mxu0 0
        %317 = vmatprep.subr.bf16.mxu0 0
        %318 = vmatpush2.bf16.msra.mxu0 0
        %319 = vmatprep.subr.bf16.mxu0 0
        %320 = vmatpush2.bf16.msra.mxu0 0
        %321 = vmatprep.subr.bf16.mxu0 0
        %322 = vmatpush2.bf16.msra.mxu0 0
        %323 = vmatprep.subr.bf16.mxu0 0
        %324 = vmatpush2.bf16.msra.mxu0 0
        %325 = vmatprep.subr.bf16.mxu0 0
        %326 = vmatpush2.bf16.msra.mxu0 0
        %327 = vmatprep.subr.bf16.mxu0 0
        %328 = vmatpush2.bf16.msra.mxu0 0
        %329 = vmatprep.subr.bf16.mxu0 0
        %330 = vmatpush2.bf16.msra.mxu0 0
        %331 = vmatprep.mubr.bf16.mxu0 0
        %332 = vmatmul.mubr.bf16.gmra.mxu0 %v234
        %v333 = vpop.f32.mrf.mxu0
        %v334 = vadd.f32 0.0, %v333
        %v335 = vpop.f32.mrf.mxu0
        %v336 = vpop.f32.mrf.mxu0
        %v337 = vpop.f32.mrf.mxu0
        %338 = vdwg.mxu0
        %v339 = vrcp.pop %v233
        %v340 = vmul.f32 -1.0, %v339
        %v341 = vmul.f32 %v334, %v340
        %v342 = vld [vmem:[%s224] sm:$0xff]
        %v343 = vld [vmem:[%s3] sm:$0xf]
        %345 = vset.pattern.permute.xlu0 0
        %346 = vperm.xlu0 %345, %v342
        %v347 = vpop.permute.xlu0 %346
        %v349 = vlaneseq
        %v350 = vshrl.u32 %v349, 7
        %v351 = vsub.s32 0, %v350
        %v352 = vrot.slane %v343, %v351
        %v353 = vsub.f32 %v347, %v352
        %v354 = vand.u32 2147483647, %v353
        %355 = vset.pattern.permute.xlu0 1
        %356 = vperm.xlu0 %355, %v342
        %v357 = vpop.permute.xlu0 %356
        %v359 = vlaneseq
        %v360 = vshrl.u32 %v359, 7
        %v361 = vsub.s32 1, %v360
        %v362 = vrot.slane %v343, %v361
        %v363 = vsub.f32 %v357, %v362
        %v364 = vand.u32 2147483647, %v363
        %v365 = vadd.f32 %v354, %v364
        %366 = vset.pattern.permute.xlu0 2
        %367 = vperm.xlu0 %366, %v342
        %v368 = vpop.permute.xlu0 %367
        %v370 = vlaneseq
        %v371 = vshrl.u32 %v370, 7
        %v372 = vsub.s32 2, %v371
        %v373 = vrot.slane %v343, %v372
        %v374 = vsub.f32 %v368, %v373
        %v375 = vand.u32 2147483647, %v374
        %v376 = vadd.f32 %v365, %v375
        %377 = vset.pattern.permute.xlu0 3
        %378 = vperm.xlu0 %377, %v342
        %v379 = vpop.permute.xlu0 %378
        %v381 = vlaneseq
        %v382 = vshrl.u32 %v381, 7
        %v383 = vsub.s32 3, %v382
        %v384 = vrot.slane %v343, %v383
        %v385 = vsub.f32 %v379, %v384
        %v386 = vand.u32 2147483647, %v385
        %v387 = vadd.f32 %v376, %v386
        %v388 = vmul.f32 %v342, 0.5
        %390 = vrot.lane.b32.xlu0 %v388, 126
        %v391 = vpop.permute.xlu0 %390
        %v393 = vsub.f32 %v342, %v391
        %v394 = vadd.f32 %v342, %v391
        %v395 = vmul.f32 %v343, 0.5
        %v397 = vrot.slane %v395, 2
        %v399 = vsub.f32 %v343, %v397
        %v400 = vadd.f32 %v343, %v397
        %v401 = vsub.f32 %v394, %v393
        %403 = vrot.lane.b32.xlu0 %v401, 127
        %v404 = vpop.permute.xlu0 %403
        %v406 = vmul.f32 %v401, %v404
        %v407 = vsub.f32 %v400, %v399
        %v409 = vrot.slane %v407, 1
        %v411 = vmul.f32 %v407, %v409
        %413 = vset.pattern.permute.xlu0 0
        %414 = vperm.xlu0 %413, %v394
        %v415 = vpop.permute.xlu0 %414
        %v417 = vlaneseq
        %v418 = vshrl.u32 %v417, 7
        %v419 = vsub.s32 0, %v418
        %v420 = vrot.slane %v400, %v419
        %v421 = vmin.f32 %v415, %v420
        %423 = vset.pattern.permute.xlu0 0
        %424 = vperm.xlu0 %423, %v393
        %v425 = vpop.permute.xlu0 %424
        %v427 = vlaneseq
        %v428 = vshrl.u32 %v427, 7
        %v429 = vsub.s32 0, %v428
        %v430 = vrot.slane %v399, %v429
        %v431 = vmax.f32 %v425, %v430
        %v432 = vsub.f32 %v421, %v431
        %v433 = vmax.f32 %v432, 0.0
        %434 = vset.pattern.permute.xlu0 1
        %435 = vperm.xlu0 %434, %v394
        %v436 = vpop.permute.xlu0 %435
        %v438 = vlaneseq
        %v439 = vshrl.u32 %v438, 7
        %v440 = vsub.s32 1, %v439
        %v441 = vrot.slane %v400, %v440
        %v442 = vmin.f32 %v436, %v441
        %443 = vset.pattern.permute.xlu0 1
        %444 = vperm.xlu0 %443, %v393
        %v445 = vpop.permute.xlu0 %444
        %v447 = vlaneseq
        %v448 = vshrl.u32 %v447, 7
        %v449 = vsub.s32 1, %v448
        %v450 = vrot.slane %v399, %v449
        %v451 = vmax.f32 %v445, %v450
        %v452 = vsub.f32 %v442, %v451
        %v453 = vmax.f32 %v452, 0.0
        %v454 = vmul.f32 %v433, %v453
        %v455 = vmax.f32 %v415, %v420
        %v456 = vmin.f32 %v425, %v430
        %v457 = vsub.f32 %v455, %v456
        %v458 = vmax.f32 %v457, 0.0
        %v459 = vmax.f32 %v436, %v441
        %v460 = vmin.f32 %v445, %v450
        %v461 = vsub.f32 %v459, %v460
        %v462 = vmax.f32 %v461, 0.0
        %v463 = vmul.f32 %v458, %v462
        %465 = vset.pattern.permute.xlu0 0
        %466 = vperm.xlu0 %465, %v406
        %v467 = vpop.permute.xlu0 %466
        %v469 = vlaneseq
        %v470 = vshrl.u32 %v469, 7
        %v471 = vsub.s32 0, %v470
        %v472 = vrot.slane %v411, %v471
        %v473 = vadd.f32 %v467, %v472
        %v474 = vsub.f32 %v473, %v454
        %v475 = vrcp.pop %v474
        %v476 = vmul.f32 %v474, %v475
        %v477 = vsub.f32 2.0, %v476
        %v478 = vmul.f32 %v475, %v477
        %v479 = vrcp.pop %v463
        %v480 = vmul.f32 %v463, %v479
        %v481 = vsub.f32 2.0, %v480
        %v482 = vmul.f32 %v479, %v481
        %v483 = vmul.f32 %v454, %v478
        %v484 = vsub.f32 1.0, %v483
        %v485 = vmul.f32 %v474, %v482
        %v486 = vsub.f32 %v484, %v485
        %v487 = vadd.f32 %v341, %v387
        %v488 = vadd.f32 %v487, %v486
        %489 = vst [vmem:[%s216] sm:$0xff] %v488
        %s490 = sand.u32 %s121, 1
        %s491 = scalar_lea.sflag [#allocation4], %s490
        %s492 = sand.u32 %s121, 1
        %s493 = smul.addr %s492, 8
        %s494 = scalar_lea.vmem [#allocation5], %s493
        // Predicated region
        $region41: #{tpu_custom_call.1} parent=35 // pred_check
          %p495 = pneg %p131
        $region42: #{tpu_custom_call.1} parent=35 // pred_check_branch
          %497 = sbr.rel (%p495) target = $region44
        $region43: #{tpu_custom_call.1} parent=35 // pred_region
          %s499 = ssub.s32 128, 128
          %500 = vsyncadd %s491, %s499
          %s501 = smul.addr %s19, 128
          %s502 = scalar_lea.hbm %s4, %s501
          %s504 = sshll.u32 %s494, 4
          %s505 = int_to_ptr.vmem [resolvable:$true] %s504
          %507 = dma.vmem_to_hbm [thread:$0]  %s505, 128, %s502, %s491
        $region44: #{tpu_custom_call.1} parent=35 // pred_fallthru
          _
      $region36: #{tpu_custom_call.1} parent=5 // pred_fallthru
        _
      %p508 = scmp.le.s32.totalorder 2, %s14
      // Predicated region
      $region45: #{tpu_custom_call.1} parent=5 // pred_check
        %p509 = pneg %p508
      $region46: #{tpu_custom_call.1} parent=5 // pred_check_branch
        %511 = sbr.rel (%p509) target = $region48
      $region47: #{tpu_custom_call.1} parent=5 // pred_region
        %s512 = ssub.s32 %s14, 2
        // Predicated region
        $region49: #{tpu_custom_call.1} parent=47 // pred_check
          %p513 = pneg %p137
        $region50: #{tpu_custom_call.1} parent=47 // pred_check_branch
          %515 = sbr.rel (%p513) target = $region52
        $region51: #{tpu_custom_call.1} parent=47 // pred_region
          %s516 = sand.u32 %s122, 1
          %s517 = scalar_lea.sflag [#allocation4], %s516
          %s518 = sand.u32 %s122, 1
          %s519 = smul.addr %s518, 8
          %s520 = scalar_lea.vmem [#allocation5], %s519
          %521 = dma.done %s517, 128
        $region52: #{tpu_custom_call.1} parent=47 // pred_fallthru
          _
      $region48: #{tpu_custom_call.1} parent=5 // pred_fallthru
        _
    $region6: #{tpu_custom_call.1} parent=1 // loop_footer
      %s18 = sadd.s32 1, %s14
    $region7: #{tpu_custom_call.1} parent=1 // loop_footer_branch
      %13 = sbr.rel target = $region3
    $region8: #{tpu_custom_call.1} parent=1 // loop_exit
      _
    %522 = vsyncpa [#allocation3], 1
    %s523 = scalar_lea.sflag [#allocation3], 1
    %524 = vsyncpa %s523, 1
    %525 = vsyncpa [#allocation4], 1
    %s526 = scalar_lea.sflag [#allocation4], 1
    %527 = vsyncpa %s526, 1

// kernel: tpu_custom_call.1
$region0: #{tpu_custom_call.1}
  #allocation0 [shape = 'u32[]', space=smem, size = 0x4, offset = 0x4, fixed_abs, tag = 'smem constant byte address 0x4 - core index']
  #allocation1 [shape = 'u32[144,128]{1,0:T(1,128)}', space=vmem, size = 0x12000, scoped, tag = 'internal scratch']
  %s0 = inlined_call_operand.vmem [shape: f32[16,128], index: 0, kind: input, shape index: {}]
  %s1 = inlined_call_operand.vmem [shape: f32[16,4], index: 1, kind: input, shape index: {}]
  %s2 = inlined_call_operand.hbm [shape: bf16[128,128], index: 2, kind: input, shape index: {}]
  %s3 = inlined_call_operand.vmem [shape: f32[4,128], index: 3, kind: input, shape index: {}]
  %s4 = inlined_call_operand.hbm [shape: f32[16,128], index: 4, kind: output, shape index: {}]
  %s5 = sld [smem:[#allocation0]]
  $region53: #{tpu_custom_call.1} parent=0
    _
  %s7 = ssub.s32 1, %s5
  %s8 = scalar_select 0, %s7, %s5
  $region1: #{tpu_custom_call.1} parent=0
    #allocation2 [shape = 'u8[32768]{0}', space=vmem, size = 0x8000, scoped, tag = 'input window, operand 2, single buffered']
    #allocation3 [shape = 's32[2]{0}', space=sflag, size = 0x8, scoped, tag = 'scoped memory for tpu_custom_call.1']
    #allocation4 [shape = 's32[2]{0}', space=sflag, size = 0x8, scoped, tag = 'scoped memory for tpu_custom_call.1']
    #allocation5 [shape = 'u8[8192]{0}', space=vmem, size = 0x2000, scoped, tag = 'output window, operand 0']
    %9 = vsyncpa [#allocation3], 0
    %10 = vsyncpa [#allocation4], 0
    %s11 = scalar_lea.sflag [#allocation4], 1
    %12 = vsyncpa %s11, 0
    loop: start=0, step=1, limit=4
    $region2: #{tpu_custom_call.1} parent=1 // loop_pre_header
      _
    $region3: #{tpu_custom_call.1} parent=1 // loop_header
      %s14 = sphi 0, %s18
      %p15 = scmp.ge.s32.totalorder %s14, 4
      %s24 = sphi 0, %s26
      %s27 = sphi 0, %s24
      %s28 = sphi 0, %s27
      %s44 = sphi 0, %s28
      %s50 = sphi 0, %s52
      %s53 = sphi 0, %s50
      %s54 = sphi 0, %s53
      %s70 = sphi 0, %s54
      %s74 = sphi 0, %s74
      %s76 = sphi 0, %s74
      %s77 = sphi 0, %s76
      %s91 = sphi 0, %s77
      %s95 = sphi 0, %s95
      %s97 = sphi 0, %s95
      %s98 = sphi 0, %s97
      %s112 = sphi 0, %s98
      %s118 = sphi 0, %s120
      %s121 = sphi 0, %s118
      %s122 = sphi 0, %s121
      %s138 = sphi 0, %s122
    $region4: #{tpu_custom_call.1} parent=1 // loop_header_branch
      %17 = sbr.rel (%p15) target = $region8
    $region5: #{tpu_custom_call.1} parent=1 // loop_body
      %s19 = ssub.s32 %s14, 1
      %s20 = ssub.s32 %s14, 2
      %s21 = sadd.s32 %s14, 1
      %s22 = ssub.s32 %s14, %s21
      %p23 = scmp.eq.s32.totalorder %s22, 0
      %s25 = sadd.s32 %s24, 1
      %s26 = scalar_select %p23, %s24, %s25
      %p29 = pneg %p23
      %p30 = scmp.eq.s32.totalorder %s14, 1
      %p31 = por %p29, %p30
      %p32 = scmp.ne.s32.totalorder %s24, %s27
      %p33 = scmp.eq.s32.totalorder %s14, 0
      %p34 = por %p32, %p33
      %p35 = scmp.ne.s32.totalorder %s24, %s27
      %p36 = scmp.eq.s32.totalorder %s19, 1
      %p37 = por %p35, %p36
      %p38 = scmp.ne.s32.totalorder %s27, %s28
      %p39 = scmp.eq.s32.totalorder %s19, 0
      %p40 = por %p38, %p39
      %p41 = scmp.ne.s32.totalorder %s27, %s28
      %p42 = scmp.eq.s32.totalorder %s20, 1
      %p43 = por %p41, %p42
      %p45 = scmp.ne.s32.totalorder %s28, %s44
      %p46 = scmp.eq.s32.totalorder %s20, 0
      %p47 = por %p45, %p46
      %s48 = ssub.s32 %s14, %s21
      %p49 = scmp.eq.s32.totalorder %s48, 0
      %s51 = sadd.s32 %s50, 1
      %s52 = scalar_select %p49, %s50, %s51
      %p55 = pneg %p49
      %p56 = scmp.eq.s32.totalorder %s14, 1
      %p57 = por %p55, %p56
      %p58 = scmp.ne.s32.totalorder %s50, %s53
      %p59 = scmp.eq.s32.totalorder %s14, 0
      %p60 = por %p58, %p59
      %p61 = scmp.ne.s32.totalorder %s50, %s53
      %p62 = scmp.eq.s32.totalorder %s19, 1
      %p63 = por %p61, %p62
      %p64 = scmp.ne.s32.totalorder %s53, %s54
      %p65 = scmp.eq.s32.totalorder %s19, 0
      %p66 = por %p64, %p65
      %p67 = scmp.ne.s32.totalorder %s53, %s54
      %p68 = scmp.eq.s32.totalorder %s20, 1
      %p69 = por %p67, %p68
      %p71 = scmp.ne.s32.totalorder %s54, %s70
      %p72 = scmp.eq.s32.totalorder %s20, 0
      %p73 = por %p71, %p72
      %s75 = sadd.s32 %s74, 1
      %p78 = scmp.eq.s32.totalorder %s14, 1
      %p79 = scmp.ne.s32.totalorder %s74, %s76
      %p80 = scmp.eq.s32.totalorder %s14, 0
      %p81 = por %p79, %p80
      %p82 = scmp.ne.s32.totalorder %s74, %s76
      %p83 = scmp.eq.s32.totalorder %s19, 1
      %p84 = por %p82, %p83
      %p85 = scmp.ne.s32.totalorder %s76, %s77
      %p86 = scmp.eq.s32.totalorder %s19, 0
      %p87 = por %p85, %p86
      %p88 = scmp.ne.s32.totalorder %s76, %s77
      %p89 = scmp.eq.s32.totalorder %s20, 1
      %p90 = por %p88, %p89
      %p92 = scmp.ne.s32.totalorder %s77, %s91
      %p93 = scmp.eq.s32.totalorder %s20, 0
      %p94 = por %p92, %p93
      %s96 = sadd.s32 %s95, 1
      %p99 = scmp.eq.s32.totalorder %s14, 1
      %p100 = scmp.ne.s32.totalorder %s95, %s97
      %p101 = scmp.eq.s32.totalorder %s14, 0
      %p102 = por %p100, %p101
      %p103 = scmp.ne.s32.totalorder %s95, %s97
      %p104 = scmp.eq.s32.totalorder %s19, 1
      %p105 = por %p103, %p104
      %p106 = scmp.ne.s32.totalorder %s97, %s98
      %p107 = scmp.eq.s32.totalorder %s19, 0
      %p108 = por %p106, %p107
      %p109 = scmp.ne.s32.totalorder %s97, %s98
      %p110 = scmp.eq.s32.totalorder %s20, 1
      %p111 = por %p109, %p110
      %p113 = scmp.ne.s32.totalorder %s98, %s112
      %p114 = scmp.eq.s32.totalorder %s20, 0
      %p115 = por %p113, %p114
      %s116 = ssub.s32 %s14, %s21
      %p117 = scmp.eq.s32.totalorder %s116, 0
      %s119 = sadd.s32 %s118, 1
      %s120 = scalar_select %p117, %s118, %s119
      %p123 = pneg %p117
      %p124 = scmp.eq.s32.totalorder %s14, 1
      %p125 = por %p123, %p124
      %p126 = scmp.ne.s32.totalorder %s118, %s121
      %p127 = scmp.eq.s32.totalorder %s14, 0
      %p128 = por %p126, %p127
      %p129 = scmp.ne.s32.totalorder %s118, %s121
      %p130 = scmp.eq.s32.totalorder %s19, 1
      %p131 = por %p129, %p130
      %p132 = scmp.ne.s32.totalorder %s121, %s122
      %p133 = scmp.eq.s32.totalorder %s19, 0
      %p134 = por %p132, %p133
      %p135 = scmp.ne.s32.totalorder %s121, %s122
      %p136 = scmp.eq.s32.totalorder %s20, 1
      %p137 = por %p135, %p136
      %p139 = scmp.ne.s32.totalorder %s122, %s138
      %p140 = scmp.eq.s32.totalorder %s20, 0
      %p141 = por %p139, %p140
      %p142 = scmp.le.s32.totalorder 1, %s14
      %p143 = scmp.lt.s32.totalorder %s14, 3
      %p144 = pnand %p142, %p143
      %p145 = pneg %p144
      // Predicated region
      $region9: #{tpu_custom_call.1} parent=5 // pred_check
        _
      $region10: #{tpu_custom_call.1} parent=5 // pred_check_branch
        %147 = sbr.rel (%p144) target = $region12
      $region11: #{tpu_custom_call.1} parent=5 // pred_region
        %s148 = ssub.s32 %s14, 1
        // Predicated region
        $region13: #{tpu_custom_call.1} parent=11 // pred_check
          %p149 = pneg %p87
        $region14: #{tpu_custom_call.1} parent=11 // pred_check_branch
          %151 = sbr.rel (%p149) target = $region16
        $region15: #{tpu_custom_call.1} parent=11 // pred_region
          %s153 = ssub.s32 1024, 1024
          %154 = vsyncadd [#allocation3], %s153
          %s155 = sshll.u32 [#allocation2], 4
          %s156 = int_to_ptr.vmem [resolvable:$true] %s155
          %161 = dma.hbm_to_vmem [thread:$0]  %s2, 1024, %s156, [#allocation3], 64, 64, 4
        $region16: #{tpu_custom_call.1} parent=11 // pred_fallthru
          _
        // Predicated region
        $region17: #{tpu_custom_call.1} parent=11 // pred_check
          %p162 = pneg %p108
        $region18: #{tpu_custom_call.1} parent=11 // pred_check_branch
          %164 = sbr.rel (%p162) target = $region20
        $region19: #{tpu_custom_call.1} parent=11 // pred_region
          _
        $region20: #{tpu_custom_call.1} parent=11 // pred_fallthru
          _
      $region12: #{tpu_custom_call.1} parent=5 // pred_fallthru
        _
      %p165 = scmp.lt.s32.totalorder %s14, 2
      // Predicated region
      $region21: #{tpu_custom_call.1} parent=5 // pred_check
        %p166 = pneg %p165
      $region22: #{tpu_custom_call.1} parent=5 // pred_check_branch
        %168 = sbr.rel (%p166) target = $region24
      $region23: #{tpu_custom_call.1} parent=5 // pred_region
        // Predicated region
        $region25: #{tpu_custom_call.1} parent=23 // pred_check
          %p169 = pneg %p34
        $region26: #{tpu_custom_call.1} parent=23 // pred_check_branch
          %171 = sbr.rel (%p169) target = $region28
        $region27: #{tpu_custom_call.1} parent=23 // pred_region
          %p172 = scmp.lt.s32.totalorder %s14, 1
          %s173 = scalar_select %p172, %s14, 1
          %s174 = smul.addr %s173, 8
          %s175 = scalar_lea.vmem %s0, %s174
        $region28: #{tpu_custom_call.1} parent=23 // pred_fallthru
          _
        // Predicated region
        $region29: #{tpu_custom_call.1} parent=23 // pred_check
          %p176 = pneg %p60
        $region30: #{tpu_custom_call.1} parent=23 // pred_check_branch
          %178 = sbr.rel (%p176) target = $region32
        $region31: #{tpu_custom_call.1} parent=23 // pred_region
          %p179 = scmp.lt.s32.totalorder %s14, 1
          %s180 = scalar_select %p179, %s14, 1
          %s181 = smul.addr %s180, 8
          %s182 = scalar_lea.vmem %s1, %s181
        $region32: #{tpu_custom_call.1} parent=23 // pred_fallthru
          _
      $region24: #{tpu_custom_call.1} parent=5 // pred_fallthru
        _
      %p183 = scmp.le.s32.totalorder 1, %s14
      %p184 = scmp.lt.s32.totalorder %s14, 3
      %p185 = pnand %p183, %p184
      %p186 = pneg %p185
      // Predicated region
      $region33: #{tpu_custom_call.1} parent=5 // pred_check
        _
      $region34: #{tpu_custom_call.1} parent=5 // pred_check_branch
        %188 = sbr.rel (%p185) target = $region36
      $region35: #{tpu_custom_call.1} parent=5 // pred_region
        %s189 = ssub.s32 %s14, 1
        // Predicated region
        $region37: #{tpu_custom_call.1} parent=35 // pred_check
          %p190 = pneg %p87
        $region38: #{tpu_custom_call.1} parent=35 // pred_check_branch
          %192 = sbr.rel (%p190) target = $region40
        $region39: #{tpu_custom_call.1} parent=35 // pred_region
          %193 = dma.done [#allocation3], 1024
        $region40: #{tpu_custom_call.1} parent=35 // pred_fallthru
          _
        %p194 = scmp.lt.s32.totalorder %s19, 1
        %s195 = scalar_select %p194, %s19, 1
        %s196 = smul.addr %s195, 8
        %s197 = scalar_lea.vmem %s0, %s196
        %p198 = pneg %p40
        %p199 = pneg %p37
        %p200 = scmp.lt.s32.totalorder %s19, 1
        %s201 = scalar_select %p200, %s19, 1
        %s202 = smul.addr %s201, 8
        %s203 = scalar_lea.vmem %s1, %s202
        %p204 = pneg %p66
        %p205 = pneg %p63
        %p206 = pneg %p87
        %p207 = pneg %p84
        %p208 = pneg %p108
        %p209 = pneg %p105
        %p210 = pneg %p134
        %p211 = pneg %p131
        %s212 = sand.u32 %s121, 1
        %s213 = scalar_lea.sflag [#allocation4], %s212
        %s214 = sand.u32 %s121, 1
        %s215 = smul.addr %s214, 8
        %s216 = scalar_lea.vmem [#allocation5], %s215
        %p217 = scmp.lt.s32.totalorder %s19, 1
        %s218 = scalar_select %p217, %s19, 1
        %s219 = smul.addr %s218, 8
        %s220 = scalar_lea.vmem %s0, %s219
        %p221 = scmp.lt.s32.totalorder %s19, 1
        %s222 = scalar_select %p221, %s19, 1
        %s223 = smul.addr %s222, 8
        %s224 = scalar_lea.vmem %s1, %s223
        %v226 = vld [vmem:[%s220] sm:$0xff]
        %227 = vmax.xlane.f32.xlu0 %v226
        %v228 = vpop.xlane.xlu0 %227
        %v229 = vsub.f32 %v226, %v228
        %v230 = vmul.f32 %v229, 1.442695
        %v231 = vpow.pop %v230
        %232 = vadd.xlane.f32.xlu0 %v231
        %v233 = vpop.xlane.xlu0 %232
        %v234 = vpack.c.bf16 %v231, %v231
        %v235 = vld [vmem:[#allocation2] sm:$0xf]
        %v236 = vld [vmem:[#allocation2 + $0x4] sm:$0xf]
        %v237 = vld [vmem:[#allocation2 + $0x8] sm:$0xf]
        %v238 = vld [vmem:[#allocation2 + $0xc] sm:$0xf]
        %v239 = vld [vmem:[#allocation2 + $0x10] sm:$0xf]
        %v240 = vld [vmem:[#allocation2 + $0x14] sm:$0xf]
        %v241 = vld [vmem:[#allocation2 + $0x18] sm:$0xf]
        %v242 = vld [vmem:[#allocation2 + $0x1c] sm:$0xf]
        %v243 = vld [vmem:[#allocation2 + $0x20] sm:$0xf]
        %v244 = vld [vmem:[#allocation2 + $0x24] sm:$0xf]
        %v245 = vld [vmem:[#allocation2 + $0x28] sm:$0xf]
        %v246 = vld [vmem:[#allocation2 + $0x2c] sm:$0xf]
        %v247 = vld [vmem:[#allocation2 + $0x30] sm:$0xf]
        %v248 = vld [vmem:[#allocation2 + $0x34] sm:$0xf]
        %v249 = vld [vmem:[#allocation2 + $0x38] sm:$0xf]
        %v250 = vld [vmem:[#allocation2 + $0x3c] sm:$0xf]
        %v267 = vunpack.c.l.b16 %v235
        %v268 = vunpack.c.l.b16 %v236
        %v269 = vunpack.c.l.b16 %v237
        %v270 = vunpack.c.l.b16 %v238
        %v271 = vunpack.c.l.b16 %v239
        %v272 = vunpack.c.l.b16 %v240
        %v273 = vunpack.c.l.b16 %v241
        %v274 = vunpack.c.l.b16 %v242
        %v275 = vunpack.c.l.b16 %v243
        %v276 = vunpack.c.l.b16 %v244
        %v277 = vunpack.c.l.b16 %v245
        %v278 = vunpack.c.l.b16 %v246
        %v279 = vunpack.c.l.b16 %v247
        %v280 = vunpack.c.l.b16 %v248
        %v281 = vunpack.c.l.b16 %v249
        %v282 = vunpack.c.l.b16 %v250
        %v283 = vpack.c.b16 %v268, %v267
        %v284 = vpack.c.b16 %v270, %v269
        %v285 = vpack.c.b16 %v272, %v271
        %v286 = vpack.c.b16 %v274, %v273
        %v287 = vpack.c.b16 %v276, %v275
        %v288 = vpack.c.b16 %v278, %v277
        %v289 = vpack.c.b16 %v280, %v279
        %v290 = vpack.c.b16 %v282, %v281
        %299 = vmatprep.subr.bf16.mxu0 0
        %300 = vmatpush1.bf16.msra.mxu0 %v290
        %301 = vmatprep.subr.bf16.mxu0 0
        %302 = vmatpush1.bf16.msra.mxu0 %v289
        %303 = vmatprep.subr.bf16.mxu0 0
        %304 = vmatpush1.bf16.msra.mxu0 %v288
        %305 = vmatprep.subr.bf16.mxu0 0
        %306 = vmatpush1.bf16.msra.mxu0 %v287
        %307 = vmatprep.subr.bf16.mxu0 0
        %308 = vmatpush1.bf16.msra.mxu0 %v286
        %309 = vmatprep.subr.bf16.mxu0 0
        %310 = vmatpush1.bf16.msra.mxu0 %v285
        %311 = vmatprep.subr.bf16.mxu0 0
        %312 = vmatpush1.bf16.msra.mxu0 %v284
        %313 = vmatprep.subr.bf16.mxu0 0
        %314 = vmatpush1.bf16.msra.mxu0 %v283
        %315 = vmatprep.subr.bf16.mxu0 0
        %316 = vmatpush2.bf16.msra.mxu0 0
        %317 = vmatprep.subr.bf16.mxu0 0
        %318 = vmatpush2.bf16.msra.mxu0 0
        %319 = vmatprep.subr.bf16.mxu0 0
        %320 = vmatpush2.bf16.msra.mxu0 0
        %321 = vmatprep.subr.bf16.mxu0 0
        %322 = vmatpush2.bf16.msra.mxu0 0
        %323 = vmatprep.subr.bf16.mxu0 0
        %324 = vmatpush2.bf16.msra.mxu0 0
        %325 = vmatprep.subr.bf16.mxu0 0
        %326 = vmatpush2.bf16.msra.mxu0 0
        %327 = vmatprep.subr.bf16.mxu0 0
        %328 = vmatpush2.bf16.msra.mxu0 0
        %329 = vmatprep.subr.bf16.mxu0 0
        %330 = vmatpush2.bf16.msra.mxu0 0
        %331 = vmatprep.mubr.bf16.mxu0 0
        %332 = vmatmul.mubr.bf16.gmra.mxu0 %v234
        %v333 = vpop.f32.mrf.mxu0
        %v334 = vadd.f32 0.0, %v333
        %v335 = vpop.f32.mrf.mxu0
        %v336 = vpop.f32.mrf.mxu0
        %v337 = vpop.f32.mrf.mxu0
        %338 = vdwg.mxu0
        %v339 = vrcp.pop %v233
        %v340 = vmul.f32 -1.0, %v339
        %v341 = vmul.f32 %v334, %v340
        %v342 = vld [vmem:[%s224] sm:$0xff]
        %v343 = vld [vmem:[%s3] sm:$0xf]
        %345 = vset.pattern.permute.xlu0 0
        %346 = vperm.xlu0 %345, %v342
        %v347 = vpop.permute.xlu0 %346
        %v349 = vlaneseq
        %v350 = vshrl.u32 %v349, 7
        %v351 = vsub.s32 0, %v350
        %v352 = vrot.slane %v343, %v351
        %v353 = vsub.f32 %v347, %v352
        %v354 = vand.u32 2147483647, %v353
        %355 = vset.pattern.permute.xlu0 1
        %356 = vperm.xlu0 %355, %v342
        %v357 = vpop.permute.xlu0 %356
        %v359 = vlaneseq
        %v360 = vshrl.u32 %v359, 7
        %v361 = vsub.s32 1, %v360
        %v362 = vrot.slane %v343, %v361
        %v363 = vsub.f32 %v357, %v362
        %v364 = vand.u32 2147483647, %v363
        %v365 = vadd.f32 %v354, %v364
        %366 = vset.pattern.permute.xlu0 2
        %367 = vperm.xlu0 %366, %v342
        %v368 = vpop.permute.xlu0 %367
        %v370 = vlaneseq
        %v371 = vshrl.u32 %v370, 7
        %v372 = vsub.s32 2, %v371
        %v373 = vrot.slane %v343, %v372
        %v374 = vsub.f32 %v368, %v373
        %v375 = vand.u32 2147483647, %v374
        %v376 = vadd.f32 %v365, %v375
        %377 = vset.pattern.permute.xlu0 3
        %378 = vperm.xlu0 %377, %v342
        %v379 = vpop.permute.xlu0 %378
        %v381 = vlaneseq
        %v382 = vshrl.u32 %v381, 7
        %v383 = vsub.s32 3, %v382
        %v384 = vrot.slane %v343, %v383
        %v385 = vsub.f32 %v379, %v384
        %v386 = vand.u32 2147483647, %v385
        %v387 = vadd.f32 %v376, %v386
        %v388 = vmul.f32 %v342, 0.5
        %390 = vrot.lane.b32.xlu0 %v388, 126
        %v391 = vpop.permute.xlu0 %390
        %v393 = vsub.f32 %v342, %v391
        %v394 = vadd.f32 %v342, %v391
        %v395 = vmul.f32 %v343, 0.5
        %v397 = vrot.slane %v395, 2
        %v399 = vsub.f32 %v343, %v397
        %v400 = vadd.f32 %v343, %v397
        %v401 = vsub.f32 %v394, %v393
        %403 = vrot.lane.b32.xlu0 %v401, 127
        %v404 = vpop.permute.xlu0 %403
        %v406 = vmul.f32 %v401, %v404
        %v407 = vsub.f32 %v400, %v399
        %v409 = vrot.slane %v407, 1
        %v411 = vmul.f32 %v407, %v409
        %413 = vset.pattern.permute.xlu0 0
        %414 = vperm.xlu0 %413, %v394
        %v415 = vpop.permute.xlu0 %414
        %v417 = vlaneseq
        %v418 = vshrl.u32 %v417, 7
        %v419 = vsub.s32 0, %v418
        %v420 = vrot.slane %v400, %v419
        %v421 = vmin.f32 %v415, %v420
        %423 = vset.pattern.permute.xlu0 0
        %424 = vperm.xlu0 %423, %v393
        %v425 = vpop.permute.xlu0 %424
        %v427 = vlaneseq
        %v428 = vshrl.u32 %v427, 7
        %v429 = vsub.s32 0, %v428
        %v430 = vrot.slane %v399, %v429
        %v431 = vmax.f32 %v425, %v430
        %v432 = vsub.f32 %v421, %v431
        %v433 = vmax.f32 %v432, 0.0
        %434 = vset.pattern.permute.xlu0 1
        %435 = vperm.xlu0 %434, %v394
        %v436 = vpop.permute.xlu0 %435
        %v438 = vlaneseq
        %v439 = vshrl.u32 %v438, 7
        %v440 = vsub.s32 1, %v439
        %v441 = vrot.slane %v400, %v440
        %v442 = vmin.f32 %v436, %v441
        %443 = vset.pattern.permute.xlu0 1
        %444 = vperm.xlu0 %443, %v393
        %v445 = vpop.permute.xlu0 %444
        %v447 = vlaneseq
        %v448 = vshrl.u32 %v447, 7
        %v449 = vsub.s32 1, %v448
        %v450 = vrot.slane %v399, %v449
        %v451 = vmax.f32 %v445, %v450
        %v452 = vsub.f32 %v442, %v451
        %v453 = vmax.f32 %v452, 0.0
        %v454 = vmul.f32 %v433, %v453
        %v455 = vmax.f32 %v415, %v420
        %v456 = vmin.f32 %v425, %v430
        %v457 = vsub.f32 %v455, %v456
        %v458 = vmax.f32 %v457, 0.0
        %v459 = vmax.f32 %v436, %v441
        %v460 = vmin.f32 %v445, %v450
        %v461 = vsub.f32 %v459, %v460
        %v462 = vmax.f32 %v461, 0.0
        %v463 = vmul.f32 %v458, %v462
        %465 = vset.pattern.permute.xlu0 0
        %466 = vperm.xlu0 %465, %v406
        %v467 = vpop.permute.xlu0 %466
        %v469 = vlaneseq
        %v470 = vshrl.u32 %v469, 7
        %v471 = vsub.s32 0, %v470
        %v472 = vrot.slane %v411, %v471
        %v473 = vadd.f32 %v467, %v472
        %v474 = vsub.f32 %v473, %v454
        %v475 = vrcp.pop %v474
        %v476 = vmul.f32 %v474, %v475
        %v477 = vsub.f32 2.0, %v476
        %v478 = vmul.f32 %v475, %v477
        %v479 = vrcp.pop %v463
        %v480 = vmul.f32 %v463, %v479
        %v481 = vsub.f32 2.0, %v480
        %v482 = vmul.f32 %v479, %v481
        %v483 = vmul.f32 %v454, %v478
        %v484 = vsub.f32 1.0, %v483
        %v485 = vmul.f32 %v474, %v482
        %v486 = vsub.f32 %v484, %v485
        %v487 = vadd.f32 %v341, %v387
        %v488 = vadd.f32 %v487, %v486
        %489 = vst [vmem:[%s216] sm:$0xff] %v488
        %s490 = sand.u32 %s121, 1
        %s491 = scalar_lea.sflag [#allocation4], %s490
        %s492 = sand.u32 %s121, 1
        %s493 = smul.addr %s492, 8
        %s494 = scalar_lea.vmem [#allocation5], %s493
        // Predicated region
        $region41: #{tpu_custom_call.1} parent=35 // pred_check
          %p495 = pneg %p131
        $region42: #{tpu_custom_call.1} parent=35 // pred_check_branch
          %497 = sbr.rel (%p495) target = $region44
        $region43: #{tpu_custom_call.1} parent=35 // pred_region
          %s499 = ssub.s32 128, 128
          %500 = vsyncadd %s491, %s499
          %s501 = smul.addr %s19, 128
          %s502 = scalar_lea.hbm %s4, %s501
          %s504 = sshll.u32 %s494, 4
          %s505 = int_to_ptr.vmem [resolvable:$true] %s504
          %507 = dma.vmem_to_hbm [thread:$0]  %s505, 128, %s502, %s491
        $region44: #{tpu_custom_call.1} parent=35 // pred_fallthru
          _
      $region36: #{tpu_custom_call.1} parent=5 // pred_fallthru
        _
      %p508 = scmp.le.s32.totalorder 2, %s14
      // Predicated region
      $region45: #{tpu_custom_call.1} parent=5 // pred_check
        %p509 = pneg %p508
      $region46: #{tpu_custom_call.1} parent=5 // pred_check_branch
        %511 = sbr.rel (%p509) target = $region48
      $region47: #{tpu_custom_call.1} parent=5 // pred_region
        %s512 = ssub.s32 %s14, 2
        // Predicated region
        $region49: #{tpu_custom_call.1} parent=47 // pred_check
          %p513 = pneg %p137
        $region50: #{tpu_custom_call.1} parent=47 // pred_check_branch
          %515 = sbr.rel (%p513) target = $region52
        $region51: #{tpu_custom_call.1} parent=47 // pred_region
          %s516 = sand.u32 %s122, 1
          %s517 = scalar_lea.sflag [#allocation4], %s516
          %s518 = sand.u32 %s122, 1
          %s519 = smul.addr %s518, 8
          %s520 = scalar_lea.vmem [#allocation5], %s519
          %521 = dma.done %s517, 128
        $region52: #{tpu_custom_call.1} parent=47 // pred_fallthru
          _
      $region48: #{tpu_custom_call.1} parent=5 // pred_fallthru
        _
    $region6: #{tpu_custom_call.1} parent=1 // loop_footer
      %s18 = sadd.s32 1, %s14
    $region7: #{tpu_custom_call.1} parent=1 // loop_footer_branch
      %13 = sbr.rel target = $region3
    $region8: #{tpu_custom_call.1} parent=1 // loop_exit
      _
    %522 = vsyncpa [#allocation3], 1
    %s523 = scalar_lea.sflag [#allocation3], 1
    %524 = vsyncpa %s523, 1
    %525 = vsyncpa [#allocation4], 1
    %s526 = scalar_lea.sflag [#allocation4], 1
    %527 = vsyncpa %s526, 1

</llo_original>
